<compile_context>
chip_gen: v6e
topology: v6e:2x2x1
jax: 0.10.0
libtpu: 0.0.40
codegen_flags: <defaults>
</compile_context>

<pallas_src>
import jax
import jax.numpy as jnp
from jax import lax
from jax.experimental import pallas as pl
from jax.experimental.pallas import tpu as pltpu


def rnn_kernel(slab_ref, rhs_ref, w_fc_ref, b_fc_ref, out_ref):
    # slab_ref: (T, B, K) bf16  lanes [0,H)=0 (hidden slot), [H,H+I)=x_t, lane H+I=1
    # rhs_ref:  (K, K)    bf16  rows [0,H)=W_hh^T, [H,H+I)=W_ih^T, row H+I=b; cols>=H are 0
    # w_fc_ref: (K, C)    bf16  rows [0,H)=W_fc^T, rest 0
    # b_fc_ref: (1, C)    f32
    # out_ref:  (B, C)    f32   log-probabilities
    B = out_ref.shape[0]
    T = slab_ref.shape[0]
    K = slab_ref.shape[2]

    rhs = rhs_ref[...]  # loop-invariant recurrent weight block, read once

    # --- Serial recurrence: h_t = tanh([h_{t-1}, x_t, 1] @ RHS) -------------
    # Fully unrolled: T is static, so unroll=True removes loop bookkeeping and
    # lets the scheduler overlap MXU pop / EUP tanh / next-step operand setup.
    def step(t, h_pad):
        # h_pad: (B, K) bf16 carry; lanes >= H are exactly zero, so the add
        # leaves the staged x_t / bias-one lanes of slab[t] untouched.
        lhs = slab_ref[t] + h_pad
        z = jnp.dot(lhs, rhs, preferred_element_type=jnp.float32)  # cols >= H are 0
        return jnp.tanh(z).astype(jnp.bfloat16)                    # tanh(0)=0 keeps pad lanes 0

    h_last = lax.fori_loop(0, T, step, jnp.zeros((B, K), jnp.bfloat16),
                           unroll=True)

    # --- fc1 + log_softmax(dim=1) -------------------------------------------
    logits = (jnp.dot(h_last, w_fc_ref[...],
                      preferred_element_type=jnp.float32)
              + b_fc_ref[...])                                      # (B, C) f32
    m = jnp.max(logits, axis=-1, keepdims=True)
    s = logits - m
    out_ref[...] = s - jnp.log(jnp.sum(jnp.exp(s), axis=-1, keepdims=True))


def rnn_forward(x_btI, params):
    """x_btI: (B, T, I) batch-first input, like the PyTorch module."""
    w_ih, w_hh, b_ih, b_hh, w_fc, b_fc = params
    B, T, I = x_btI.shape
    H = w_hh.shape[0]
    C = w_fc.shape[0]
    K = 128                     # stacked contraction width (MXU pads K to 128 anyway)
    assert H + I + 1 <= K

    # Time-major staged input slab: lanes [0,H) left zero for the hidden-state
    # carry, lanes [H,H+I) hold x_t, lane H+I is a constant 1 for the fused bias.
    x_tb = jnp.transpose(x_btI, (1, 0, 2)).astype(jnp.float32)      # (T, B, I)
    slab = jnp.zeros((T, B, K), jnp.float32)
    slab = slab.at[:, :, H:H + I].set(x_tb)
    slab = slab.at[:, :, H + I].set(1.0)
    slab = slab.astype(jnp.bfloat16)

    # Stacked recurrent RHS; columns >= H stay zero so the carry's pad lanes
    # remain exactly zero after tanh.
    rhs = jnp.zeros((K, K), jnp.float32)
    rhs = rhs.at[:H, :H].set(w_hh.T)
    rhs = rhs.at[H:H + I, :H].set(w_ih.T)
    rhs = rhs.at[H + I, :H].set(b_ih + b_hh)
    rhs = rhs.astype(jnp.bfloat16)

    # Classifier weight padded to K rows so it consumes the (B, K) carry directly.
    w_fc_pad = jnp.zeros((K, C), jnp.float32).at[:H, :].set(w_fc.T).astype(jnp.bfloat16)

    vmem = pl.BlockSpec(memory_space=pltpu.MemorySpace.VMEM)
    return pl.pallas_call(
        rnn_kernel,
        out_shape=jax.ShapeDtypeStruct((B, C), jnp.float32),
        in_specs=[vmem] * 4,
        out_specs=vmem,
    )(slab, rhs, w_fc_pad, b_fc.reshape(1, C).astype(jnp.float32))


if __name__ == "__main__":
    # Small shapes consistent with the module: MNIST rows as a sequence.
    B, T, I, H, C = 8, 28, 28, 30, 10

    key = jax.random.PRNGKey(0)
    ks = jax.random.split(key, 7)
    k_rnn = 1.0 / jnp.sqrt(jnp.float32(H))   # nn.RNN init: U(-1/sqrt(H), 1/sqrt(H))
    k_fc = 1.0 / jnp.sqrt(jnp.float32(H))    # nn.Linear init: U(-1/sqrt(fan_in), ...)

    w_ih = jax.random.uniform(ks[0], (H, I), jnp.float32, -k_rnn, k_rnn)
    w_hh = jax.random.uniform(ks[1], (H, H), jnp.float32, -k_rnn, k_rnn)
    b_ih = jax.random.uniform(ks[2], (H,),   jnp.float32, -k_rnn, k_rnn)
    b_hh = jax.random.uniform(ks[3], (H,),   jnp.float32, -k_rnn, k_rnn)
    w_fc = jax.random.uniform(ks[4], (C, H), jnp.float32, -k_fc, k_fc)
    b_fc = jax.random.uniform(ks[5], (C,),   jnp.float32, -k_fc, k_fc)
    x = jax.random.normal(ks[6], (B, T, I), jnp.float32)

    params = (w_ih, w_hh, b_ih, b_hh, w_fc, b_fc)
    out = jax.block_until_ready(rnn_forward(x, params))

    # Pure-JAX f32 reference of the PyTorch forward pass.
    def reference(x):
        h = jnp.zeros((B, H), jnp.float32)
        for t in range(T):
            h = jnp.tanh(x[:, t] @ w_ih.T + b_ih + h @ w_hh.T + b_hh)
        logits = h @ w_fc.T + b_fc
        return jax.nn.log_softmax(logits, axis=1)

    ref_out = reference(x)
    assert out.shape == (B, C)
    # bf16 MXU operands (f32 accumulate) vs. the f32 reference -> relaxed tolerance.
    assert jnp.allclose(out, ref_out, atol=3e-2, rtol=3e-2), \
        float(jnp.max(jnp.abs(out - ref_out)))

    print("KERNEL_OK")
</pallas_src>

<mosaic_0001>
module attributes {stable_mosaic.version = 11 : i64} {
  func.func @rnn_kernel(%arg0: memref<28x8x128xbf16, #tpu.memory_space<vmem>>, %arg1: memref<128x128xbf16, #tpu.memory_space<vmem>>, %arg2: memref<128x10xbf16, #tpu.memory_space<vmem>>, %arg3: memref<1x10xf32, #tpu.memory_space<vmem>>, %arg4: memref<8x10xf32, #tpu.memory_space<vmem>>) attributes {dimension_semantics = [], scalar_prefetch = 0 : i64, scratch_operands = 0 : i64, tpu.core_type = #tpu.core_type<tc>} {
    %c0 = arith.constant 0 : index
    %c0_0 = arith.constant 0 : index
    %0 = vector.load %arg1[%c0, %c0_0] : memref<128x128xbf16, #tpu.memory_space<vmem>>, vector<128x128xbf16>
    %cst = arith.constant 0.000000e+00 : bf16
    %1 = vector.broadcast %cst : bf16 to vector<8x128xbf16>
    %c0_i32 = arith.constant 0 : i32
    %2 = arith.index_cast %c0_i32 : i32 to index
    %c0_1 = arith.constant 0 : index
    %c0_2 = arith.constant 0 : index
    %3 = vector.load %arg0[%2, %c0_1, %c0_2] : memref<28x8x128xbf16, #tpu.memory_space<vmem>>, vector<1x8x128xbf16>
    %4 = vector.shape_cast %3 : vector<1x8x128xbf16> to vector<8x128xbf16>
    %5 = arith.addf %4, %1 : vector<8x128xbf16>
    %cst_3 = arith.constant dense<0.000000e+00> : vector<8x128xf32>
    %6 = tpu.matmul %5, %0, %cst_3 {dimension_numbers = #tpu.dot_dimension_numbers<[1], [0], [0], [1], [0, 0, 1, 1], [], []>} : vector<8x128xbf16>, vector<128x128xbf16>, vector<8x128xf32> -> vector<8x128xf32>
    %7 = math.tanh %6 : vector<8x128xf32>
    %8 = arith.truncf %7 : vector<8x128xf32> to vector<8x128xbf16>
    %c1_i32 = arith.constant 1 : i32
    %9 = arith.index_cast %c1_i32 : i32 to index
    %c0_4 = arith.constant 0 : index
    %c0_5 = arith.constant 0 : index
    %10 = vector.load %arg0[%9, %c0_4, %c0_5] : memref<28x8x128xbf16, #tpu.memory_space<vmem>>, vector<1x8x128xbf16>
    %11 = vector.shape_cast %10 : vector<1x8x128xbf16> to vector<8x128xbf16>
    %12 = arith.addf %11, %8 : vector<8x128xbf16>
    %cst_6 = arith.constant dense<0.000000e+00> : vector<8x128xf32>
    %13 = tpu.matmul %12, %0, %cst_6 {dimension_numbers = #tpu.dot_dimension_numbers<[1], [0], [0], [1], [0, 0, 1, 1], [], []>} : vector<8x128xbf16>, vector<128x128xbf16>, vector<8x128xf32> -> vector<8x128xf32>
    %14 = math.tanh %13 : vector<8x128xf32>
    %15 = arith.truncf %14 : vector<8x128xf32> to vector<8x128xbf16>
    %c2_i32 = arith.constant 2 : i32
    %16 = arith.index_cast %c2_i32 : i32 to index
    %c0_7 = arith.constant 0 : index
    %c0_8 = arith.constant 0 : index
    %17 = vector.load %arg0[%16, %c0_7, %c0_8] : memref<28x8x128xbf16, #tpu.memory_space<vmem>>, vector<1x8x128xbf16>
    %18 = vector.shape_cast %17 : vector<1x8x128xbf16> to vector<8x128xbf16>
    %19 = arith.addf %18, %15 : vector<8x128xbf16>
    %cst_9 = arith.constant dense<0.000000e+00> : vector<8x128xf32>
    %20 = tpu.matmul %19, %0, %cst_9 {dimension_numbers = #tpu.dot_dimension_numbers<[1], [0], [0], [1], [0, 0, 1, 1], [], []>} : vector<8x128xbf16>, vector<128x128xbf16>, vector<8x128xf32> -> vector<8x128xf32>
    %21 = math.tanh %20 : vector<8x128xf32>
    %22 = arith.truncf %21 : vector<8x128xf32> to vector<8x128xbf16>
    %c3_i32 = arith.constant 3 : i32
    %23 = arith.index_cast %c3_i32 : i32 to index
    %c0_10 = arith.constant 0 : index
    %c0_11 = arith.constant 0 : index
    %24 = vector.load %arg0[%23, %c0_10, %c0_11] : memref<28x8x128xbf16, #tpu.memory_space<vmem>>, vector<1x8x128xbf16>
    %25 = vector.shape_cast %24 : vector<1x8x128xbf16> to vector<8x128xbf16>
    %26 = arith.addf %25, %22 : vector<8x128xbf16>
    %cst_12 = arith.constant dense<0.000000e+00> : vector<8x128xf32>
    %27 = tpu.matmul %26, %0, %cst_12 {dimension_numbers = #tpu.dot_dimension_numbers<[1], [0], [0], [1], [0, 0, 1, 1], [], []>} : vector<8x128xbf16>, vector<128x128xbf16>, vector<8x128xf32> -> vector<8x128xf32>
    %28 = math.tanh %27 : vector<8x128xf32>
    %29 = arith.truncf %28 : vector<8x128xf32> to vector<8x128xbf16>
    %c4_i32 = arith.constant 4 : i32
    %30 = arith.index_cast %c4_i32 : i32 to index
    %c0_13 = arith.constant 0 : index
    %c0_14 = arith.constant 0 : index
    %31 = vector.load %arg0[%30, %c0_13, %c0_14] : memref<28x8x128xbf16, #tpu.memory_space<vmem>>, vector<1x8x128xbf16>
    %32 = vector.shape_cast %31 : vector<1x8x128xbf16> to vector<8x128xbf16>
    %33 = arith.addf %32, %29 : vector<8x128xbf16>
    %cst_15 = arith.constant dense<0.000000e+00> : vector<8x128xf32>
    %34 = tpu.matmul %33, %0, %cst_15 {dimension_numbers = #tpu.dot_dimension_numbers<[1], [0], [0], [1], [0, 0, 1, 1], [], []>} : vector<8x128xbf16>, vector<128x128xbf16>, vector<8x128xf32> -> vector<8x128xf32>
    %35 = math.tanh %34 : vector<8x128xf32>
    %36 = arith.truncf %35 : vector<8x128xf32> to vector<8x128xbf16>
    %c5_i32 = arith.constant 5 : i32
    %37 = arith.index_cast %c5_i32 : i32 to index
    %c0_16 = arith.constant 0 : index
    %c0_17 = arith.constant 0 : index
    %38 = vector.load %arg0[%37, %c0_16, %c0_17] : memref<28x8x128xbf16, #tpu.memory_space<vmem>>, vector<1x8x128xbf16>
    %39 = vector.shape_cast %38 : vector<1x8x128xbf16> to vector<8x128xbf16>
    %40 = arith.addf %39, %36 : vector<8x128xbf16>
    %cst_18 = arith.constant dense<0.000000e+00> : vector<8x128xf32>
    %41 = tpu.matmul %40, %0, %cst_18 {dimension_numbers = #tpu.dot_dimension_numbers<[1], [0], [0], [1], [0, 0, 1, 1], [], []>} : vector<8x128xbf16>, vector<128x128xbf16>, vector<8x128xf32> -> vector<8x128xf32>
    %42 = math.tanh %41 : vector<8x128xf32>
    %43 = arith.truncf %42 : vector<8x128xf32> to vector<8x128xbf16>
    %c6_i32 = arith.constant 6 : i32
    %44 = arith.index_cast %c6_i32 : i32 to index
    %c0_19 = arith.constant 0 : index
    %c0_20 = arith.constant 0 : index
    %45 = vector.load %arg0[%44, %c0_19, %c0_20] : memref<28x8x128xbf16, #tpu.memory_space<vmem>>, vector<1x8x128xbf16>
    %46 = vector.shape_cast %45 : vector<1x8x128xbf16> to vector<8x128xbf16>
    %47 = arith.addf %46, %43 : vector<8x128xbf16>
    %cst_21 = arith.constant dense<0.000000e+00> : vector<8x128xf32>
    %48 = tpu.matmul %47, %0, %cst_21 {dimension_numbers = #tpu.dot_dimension_numbers<[1], [0], [0], [1], [0, 0, 1, 1], [], []>} : vector<8x128xbf16>, vector<128x128xbf16>, vector<8x128xf32> -> vector<8x128xf32>
    %49 = math.tanh %48 : vector<8x128xf32>
    %50 = arith.truncf %49 : vector<8x128xf32> to vector<8x128xbf16>
    %c7_i32 = arith.constant 7 : i32
    %51 = arith.index_cast %c7_i32 : i32 to index
    %c0_22 = arith.constant 0 : index
    %c0_23 = arith.constant 0 : index
    %52 = vector.load %arg0[%51, %c0_22, %c0_23] : memref<28x8x128xbf16, #tpu.memory_space<vmem>>, vector<1x8x128xbf16>
    %53 = vector.shape_cast %52 : vector<1x8x128xbf16> to vector<8x128xbf16>
    %54 = arith.addf %53, %50 : vector<8x128xbf16>
    %cst_24 = arith.constant dense<0.000000e+00> : vector<8x128xf32>
    %55 = tpu.matmul %54, %0, %cst_24 {dimension_numbers = #tpu.dot_dimension_numbers<[1], [0], [0], [1], [0, 0, 1, 1], [], []>} : vector<8x128xbf16>, vector<128x128xbf16>, vector<8x128xf32> -> vector<8x128xf32>
    %56 = math.tanh %55 : vector<8x128xf32>
    %57 = arith.truncf %56 : vector<8x128xf32> to vector<8x128xbf16>
    %c8_i32 = arith.constant 8 : i32
    %58 = arith.index_cast %c8_i32 : i32 to index
    %c0_25 = arith.constant 0 : index
    %c0_26 = arith.constant 0 : index
    %59 = vector.load %arg0[%58, %c0_25, %c0_26] : memref<28x8x128xbf16, #tpu.memory_space<vmem>>, vector<1x8x128xbf16>
    %60 = vector.shape_cast %59 : vector<1x8x128xbf16> to vector<8x128xbf16>
    %61 = arith.addf %60, %57 : vector<8x128xbf16>
    %cst_27 = arith.constant dense<0.000000e+00> : vector<8x128xf32>
    %62 = tpu.matmul %61, %0, %cst_27 {dimension_numbers = #tpu.dot_dimension_numbers<[1], [0], [0], [1], [0, 0, 1, 1], [], []>} : vector<8x128xbf16>, vector<128x128xbf16>, vector<8x128xf32> -> vector<8x128xf32>
    %63 = math.tanh %62 : vector<8x128xf32>
    %64 = arith.truncf %63 : vector<8x128xf32> to vector<8x128xbf16>
    %c9_i32 = arith.constant 9 : i32
    %65 = arith.index_cast %c9_i32 : i32 to index
    %c0_28 = arith.constant 0 : index
    %c0_29 = arith.constant 0 : index
    %66 = vector.load %arg0[%65, %c0_28, %c0_29] : memref<28x8x128xbf16, #tpu.memory_space<vmem>>, vector<1x8x128xbf16>
    %67 = vector.shape_cast %66 : vector<1x8x128xbf16> to vector<8x128xbf16>
    %68 = arith.addf %67, %64 : vector<8x128xbf16>
    %cst_30 = arith.constant dense<0.000000e+00> : vector<8x128xf32>
    %69 = tpu.matmul %68, %0, %cst_30 {dimension_numbers = #tpu.dot_dimension_numbers<[1], [0], [0], [1], [0, 0, 1, 1], [], []>} : vector<8x128xbf16>, vector<128x128xbf16>, vector<8x128xf32> -> vector<8x128xf32>
    %70 = math.tanh %69 : vector<8x128xf32>
    %71 = arith.truncf %70 : vector<8x128xf32> to vector<8x128xbf16>
    %c10_i32 = arith.constant 10 : i32
    %72 = arith.index_cast %c10_i32 : i32 to index
    %c0_31 = arith.constant 0 : index
    %c0_32 = arith.constant 0 : index
    %73 = vector.load %arg0[%72, %c0_31, %c0_32] : memref<28x8x128xbf16, #tpu.memory_space<vmem>>, vector<1x8x128xbf16>
    %74 = vector.shape_cast %73 : vector<1x8x128xbf16> to vector<8x128xbf16>
    %75 = arith.addf %74, %71 : vector<8x128xbf16>
    %cst_33 = arith.constant dense<0.000000e+00> : vector<8x128xf32>
    %76 = tpu.matmul %75, %0, %cst_33 {dimension_numbers = #tpu.dot_dimension_numbers<[1], [0], [0], [1], [0, 0, 1, 1], [], []>} : vector<8x128xbf16>, vector<128x128xbf16>, vector<8x128xf32> -> vector<8x128xf32>
    %77 = math.tanh %76 : vector<8x128xf32>
    %78 = arith.truncf %77 : vector<8x128xf32> to vector<8x128xbf16>
    %c11_i32 = arith.constant 11 : i32
    %79 = arith.index_cast %c11_i32 : i32 to index
    %c0_34 = arith.constant 0 : index
    %c0_35 = arith.constant 0 : index
    %80 = vector.load %arg0[%79, %c0_34, %c0_35] : memref<28x8x128xbf16, #tpu.memory_space<vmem>>, vector<1x8x128xbf16>
    %81 = vector.shape_cast %80 : vector<1x8x128xbf16> to vector<8x128xbf16>
    %82 = arith.addf %81, %78 : vector<8x128xbf16>
    %cst_36 = arith.constant dense<0.000000e+00> : vector<8x128xf32>
    %83 = tpu.matmul %82, %0, %cst_36 {dimension_numbers = #tpu.dot_dimension_numbers<[1], [0], [0], [1], [0, 0, 1, 1], [], []>} : vector<8x128xbf16>, vector<128x128xbf16>, vector<8x128xf32> -> vector<8x128xf32>
    %84 = math.tanh %83 : vector<8x128xf32>
    %85 = arith.truncf %84 : vector<8x128xf32> to vector<8x128xbf16>
    %c12_i32 = arith.constant 12 : i32
    %86 = arith.index_cast %c12_i32 : i32 to index
    %c0_37 = arith.constant 0 : index
    %c0_38 = arith.constant 0 : index
    %87 = vector.load %arg0[%86, %c0_37, %c0_38] : memref<28x8x128xbf16, #tpu.memory_space<vmem>>, vector<1x8x128xbf16>
    %88 = vector.shape_cast %87 : vector<1x8x128xbf16> to vector<8x128xbf16>
    %89 = arith.addf %88, %85 : vector<8x128xbf16>
    %cst_39 = arith.constant dense<0.000000e+00> : vector<8x128xf32>
    %90 = tpu.matmul %89, %0, %cst_39 {dimension_numbers = #tpu.dot_dimension_numbers<[1], [0], [0], [1], [0, 0, 1, 1], [], []>} : vector<8x128xbf16>, vector<128x128xbf16>, vector<8x128xf32> -> vector<8x128xf32>
    %91 = math.tanh %90 : vector<8x128xf32>
    %92 = arith.truncf %91 : vector<8x128xf32> to vector<8x128xbf16>
    %c13_i32 = arith.constant 13 : i32
    %93 = arith.index_cast %c13_i32 : i32 to index
    %c0_40 = arith.constant 0 : index
    %c0_41 = arith.constant 0 : index
    %94 = vector.load %arg0[%93, %c0_40, %c0_41] : memref<28x8x128xbf16, #tpu.memory_space<vmem>>, vector<1x8x128xbf16>
    %95 = vector.shape_cast %94 : vector<1x8x128xbf16> to vector<8x128xbf16>
    %96 = arith.addf %95, %92 : vector<8x128xbf16>
    %cst_42 = arith.constant dense<0.000000e+00> : vector<8x128xf32>
    %97 = tpu.matmul %96, %0, %cst_42 {dimension_numbers = #tpu.dot_dimension_numbers<[1], [0], [0], [1], [0, 0, 1, 1], [], []>} : vector<8x128xbf16>, vector<128x128xbf16>, vector<8x128xf32> -> vector<8x128xf32>
    %98 = math.tanh %97 : vector<8x128xf32>
    %99 = arith.truncf %98 : vector<8x128xf32> to vector<8x128xbf16>
    %c14_i32 = arith.constant 14 : i32
    %100 = arith.index_cast %c14_i32 : i32 to index
    %c0_43 = arith.constant 0 : index
    %c0_44 = arith.constant 0 : index
    %101 = vector.load %arg0[%100, %c0_43, %c0_44] : memref<28x8x128xbf16, #tpu.memory_space<vmem>>, vector<1x8x128xbf16>
    %102 = vector.shape_cast %101 : vector<1x8x128xbf16> to vector<8x128xbf16>
    %103 = arith.addf %102, %99 : vector<8x128xbf16>
    %cst_45 = arith.constant dense<0.000000e+00> : vector<8x128xf32>
    %104 = tpu.matmul %103, %0, %cst_45 {dimension_numbers = #tpu.dot_dimension_numbers<[1], [0], [0], [1], [0, 0, 1, 1], [], []>} : vector<8x128xbf16>, vector<128x128xbf16>, vector<8x128xf32> -> vector<8x128xf32>
    %105 = math.tanh %104 : vector<8x128xf32>
    %106 = arith.truncf %105 : vector<8x128xf32> to vector<8x128xbf16>
    %c15_i32 = arith.constant 15 : i32
    %107 = arith.index_cast %c15_i32 : i32 to index
    %c0_46 = arith.constant 0 : index
    %c0_47 = arith.constant 0 : index
    %108 = vector.load %arg0[%107, %c0_46, %c0_47] : memref<28x8x128xbf16, #tpu.memory_space<vmem>>, vector<1x8x128xbf16>
    %109 = vector.shape_cast %108 : vector<1x8x128xbf16> to vector<8x128xbf16>
    %110 = arith.addf %109, %106 : vector<8x128xbf16>
    %cst_48 = arith.constant dense<0.000000e+00> : vector<8x128xf32>
    %111 = tpu.matmul %110, %0, %cst_48 {dimension_numbers = #tpu.dot_dimension_numbers<[1], [0], [0], [1], [0, 0, 1, 1], [], []>} : vector<8x128xbf16>, vector<128x128xbf16>, vector<8x128xf32> -> vector<8x128xf32>
    %112 = math.tanh %111 : vector<8x128xf32>
    %113 = arith.truncf %112 : vector<8x128xf32> to vector<8x128xbf16>
    %c16_i32 = arith.constant 16 : i32
    %114 = arith.index_cast %c16_i32 : i32 to index
    %c0_49 = arith.constant 0 : index
    %c0_50 = arith.constant 0 : index
    %115 = vector.load %arg0[%114, %c0_49, %c0_50] : memref<28x8x128xbf16, #tpu.memory_space<vmem>>, vector<1x8x128xbf16>
    %116 = vector.shape_cast %115 : vector<1x8x128xbf16> to vector<8x128xbf16>
    %117 = arith.addf %116, %113 : vector<8x128xbf16>
    %cst_51 = arith.constant dense<0.000000e+00> : vector<8x128xf32>
    %118 = tpu.matmul %117, %0, %cst_51 {dimension_numbers = #tpu.dot_dimension_numbers<[1], [0], [0], [1], [0, 0, 1, 1], [], []>} : vector<8x128xbf16>, vector<128x128xbf16>, vector<8x128xf32> -> vector<8x128xf32>
    %119 = math.tanh %118 : vector<8x128xf32>
    %120 = arith.truncf %119 : vector<8x128xf32> to vector<8x128xbf16>
    %c17_i32 = arith.constant 17 : i32
    %121 = arith.index_cast %c17_i32 : i32 to index
    %c0_52 = arith.constant 0 : index
    %c0_53 = arith.constant 0 : index
    %122 = vector.load %arg0[%121, %c0_52, %c0_53] : memref<28x8x128xbf16, #tpu.memory_space<vmem>>, vector<1x8x128xbf16>
    %123 = vector.shape_cast %122 : vector<1x8x128xbf16> to vector<8x128xbf16>
    %124 = arith.addf %123, %120 : vector<8x128xbf16>
    %cst_54 = arith.constant dense<0.000000e+00> : vector<8x128xf32>
    %125 = tpu.matmul %124, %0, %cst_54 {dimension_numbers = #tpu.dot_dimension_numbers<[1], [0], [0], [1], [0, 0, 1, 1], [], []>} : vector<8x128xbf16>, vector<128x128xbf16>, vector<8x128xf32> -> vector<8x128xf32>
    %126 = math.tanh %125 : vector<8x128xf32>
    %127 = arith.truncf %126 : vector<8x128xf32> to vector<8x128xbf16>
    %c18_i32 = arith.constant 18 : i32
    %128 = arith.index_cast %c18_i32 : i32 to index
    %c0_55 = arith.constant 0 : index
    %c0_56 = arith.constant 0 : index
    %129 = vector.load %arg0[%128, %c0_55, %c0_56] : memref<28x8x128xbf16, #tpu.memory_space<vmem>>, vector<1x8x128xbf16>
    %130 = vector.shape_cast %129 : vector<1x8x128xbf16> to vector<8x128xbf16>
    %131 = arith.addf %130, %127 : vector<8x128xbf16>
    %cst_57 = arith.constant dense<0.000000e+00> : vector<8x128xf32>
    %132 = tpu.matmul %131, %0, %cst_57 {dimension_numbers = #tpu.dot_dimension_numbers<[1], [0], [0], [1], [0, 0, 1, 1], [], []>} : vector<8x128xbf16>, vector<128x128xbf16>, vector<8x128xf32> -> vector<8x128xf32>
    %133 = math.tanh %132 : vector<8x128xf32>
    %134 = arith.truncf %133 : vector<8x128xf32> to vector<8x128xbf16>
    %c19_i32 = arith.constant 19 : i32
    %135 = arith.index_cast %c19_i32 : i32 to index
    %c0_58 = arith.constant 0 : index
    %c0_59 = arith.constant 0 : index
    %136 = vector.load %arg0[%135, %c0_58, %c0_59] : memref<28x8x128xbf16, #tpu.memory_space<vmem>>, vector<1x8x128xbf16>
    %137 = vector.shape_cast %136 : vector<1x8x128xbf16> to vector<8x128xbf16>
    %138 = arith.addf %137, %134 : vector<8x128xbf16>
    %cst_60 = arith.constant dense<0.000000e+00> : vector<8x128xf32>
    %139 = tpu.matmul %138, %0, %cst_60 {dimension_numbers = #tpu.dot_dimension_numbers<[1], [0], [0], [1], [0, 0, 1, 1], [], []>} : vector<8x128xbf16>, vector<128x128xbf16>, vector<8x128xf32> -> vector<8x128xf32>
    %140 = math.tanh %139 : vector<8x128xf32>
    %141 = arith.truncf %140 : vector<8x128xf32> to vector<8x128xbf16>
    %c20_i32 = arith.constant 20 : i32
    %142 = arith.index_cast %c20_i32 : i32 to index
    %c0_61 = arith.constant 0 : index
    %c0_62 = arith.constant 0 : index
    %143 = vector.load %arg0[%142, %c0_61, %c0_62] : memref<28x8x128xbf16, #tpu.memory_space<vmem>>, vector<1x8x128xbf16>
    %144 = vector.shape_cast %143 : vector<1x8x128xbf16> to vector<8x128xbf16>
    %145 = arith.addf %144, %141 : vector<8x128xbf16>
    %cst_63 = arith.constant dense<0.000000e+00> : vector<8x128xf32>
    %146 = tpu.matmul %145, %0, %cst_63 {dimension_numbers = #tpu.dot_dimension_numbers<[1], [0], [0], [1], [0, 0, 1, 1], [], []>} : vector<8x128xbf16>, vector<128x128xbf16>, vector<8x128xf32> -> vector<8x128xf32>
    %147 = math.tanh %146 : vector<8x128xf32>
    %148 = arith.truncf %147 : vector<8x128xf32> to vector<8x128xbf16>
    %c21_i32 = arith.constant 21 : i32
    %149 = arith.index_cast %c21_i32 : i32 to index
    %c0_64 = arith.constant 0 : index
    %c0_65 = arith.constant 0 : index
    %150 = vector.load %arg0[%149, %c0_64, %c0_65] : memref<28x8x128xbf16, #tpu.memory_space<vmem>>, vector<1x8x128xbf16>
    %151 = vector.shape_cast %150 : vector<1x8x128xbf16> to vector<8x128xbf16>
    %152 = arith.addf %151, %148 : vector<8x128xbf16>
    %cst_66 = arith.constant dense<0.000000e+00> : vector<8x128xf32>
    %153 = tpu.matmul %152, %0, %cst_66 {dimension_numbers = #tpu.dot_dimension_numbers<[1], [0], [0], [1], [0, 0, 1, 1], [], []>} : vector<8x128xbf16>, vector<128x128xbf16>, vector<8x128xf32> -> vector<8x128xf32>
    %154 = math.tanh %153 : vector<8x128xf32>
    %155 = arith.truncf %154 : vector<8x128xf32> to vector<8x128xbf16>
    %c22_i32 = arith.constant 22 : i32
    %156 = arith.index_cast %c22_i32 : i32 to index
    %c0_67 = arith.constant 0 : index
    %c0_68 = arith.constant 0 : index
    %157 = vector.load %arg0[%156, %c0_67, %c0_68] : memref<28x8x128xbf16, #tpu.memory_space<vmem>>, vector<1x8x128xbf16>
    %158 = vector.shape_cast %157 : vector<1x8x128xbf16> to vector<8x128xbf16>
    %159 = arith.addf %158, %155 : vector<8x128xbf16>
    %cst_69 = arith.constant dense<0.000000e+00> : vector<8x128xf32>
    %160 = tpu.matmul %159, %0, %cst_69 {dimension_numbers = #tpu.dot_dimension_numbers<[1], [0], [0], [1], [0, 0, 1, 1], [], []>} : vector<8x128xbf16>, vector<128x128xbf16>, vector<8x128xf32> -> vector<8x128xf32>
    %161 = math.tanh %160 : vector<8x128xf32>
    %162 = arith.truncf %161 : vector<8x128xf32> to vector<8x128xbf16>
    %c23_i32 = arith.constant 23 : i32
    %163 = arith.index_cast %c23_i32 : i32 to index
    %c0_70 = arith.constant 0 : index
    %c0_71 = arith.constant 0 : index
    %164 = vector.load %arg0[%163, %c0_70, %c0_71] : memref<28x8x128xbf16, #tpu.memory_space<vmem>>, vector<1x8x128xbf16>
    %165 = vector.shape_cast %164 : vector<1x8x128xbf16> to vector<8x128xbf16>
    %166 = arith.addf %165, %162 : vector<8x128xbf16>
    %cst_72 = arith.constant dense<0.000000e+00> : vector<8x128xf32>
    %167 = tpu.matmul %166, %0, %cst_72 {dimension_numbers = #tpu.dot_dimension_numbers<[1], [0], [0], [1], [0, 0, 1, 1], [], []>} : vector<8x128xbf16>, vector<128x128xbf16>, vector<8x128xf32> -> vector<8x128xf32>
    %168 = math.tanh %167 : vector<8x128xf32>
    %169 = arith.truncf %168 : vector<8x128xf32> to vector<8x128xbf16>
    %c24_i32 = arith.constant 24 : i32
    %170 = arith.index_cast %c24_i32 : i32 to index
    %c0_73 = arith.constant 0 : index
    %c0_74 = arith.constant 0 : index
    %171 = vector.load %arg0[%170, %c0_73, %c0_74] : memref<28x8x128xbf16, #tpu.memory_space<vmem>>, vector<1x8x128xbf16>
    %172 = vector.shape_cast %171 : vector<1x8x128xbf16> to vector<8x128xbf16>
    %173 = arith.addf %172, %169 : vector<8x128xbf16>
    %cst_75 = arith.constant dense<0.000000e+00> : vector<8x128xf32>
    %174 = tpu.matmul %173, %0, %cst_75 {dimension_numbers = #tpu.dot_dimension_numbers<[1], [0], [0], [1], [0, 0, 1, 1], [], []>} : vector<8x128xbf16>, vector<128x128xbf16>, vector<8x128xf32> -> vector<8x128xf32>
    %175 = math.tanh %174 : vector<8x128xf32>
    %176 = arith.truncf %175 : vector<8x128xf32> to vector<8x128xbf16>
    %c25_i32 = arith.constant 25 : i32
    %177 = arith.index_cast %c25_i32 : i32 to index
    %c0_76 = arith.constant 0 : index
    %c0_77 = arith.constant 0 : index
    %178 = vector.load %arg0[%177, %c0_76, %c0_77] : memref<28x8x128xbf16, #tpu.memory_space<vmem>>, vector<1x8x128xbf16>
    %179 = vector.shape_cast %178 : vector<1x8x128xbf16> to vector<8x128xbf16>
    %180 = arith.addf %179, %176 : vector<8x128xbf16>
    %cst_78 = arith.constant dense<0.000000e+00> : vector<8x128xf32>
    %181 = tpu.matmul %180, %0, %cst_78 {dimension_numbers = #tpu.dot_dimension_numbers<[1], [0], [0], [1], [0, 0, 1, 1], [], []>} : vector<8x128xbf16>, vector<128x128xbf16>, vector<8x128xf32> -> vector<8x128xf32>
    %182 = math.tanh %181 : vector<8x128xf32>
    %183 = arith.truncf %182 : vector<8x128xf32> to vector<8x128xbf16>
    %c26_i32 = arith.constant 26 : i32
    %184 = arith.index_cast %c26_i32 : i32 to index
    %c0_79 = arith.constant 0 : index
    %c0_80 = arith.constant 0 : index
    %185 = vector.load %arg0[%184, %c0_79, %c0_80] : memref<28x8x128xbf16, #tpu.memory_space<vmem>>, vector<1x8x128xbf16>
    %186 = vector.shape_cast %185 : vector<1x8x128xbf16> to vector<8x128xbf16>
    %187 = arith.addf %186, %183 : vector<8x128xbf16>
    %cst_81 = arith.constant dense<0.000000e+00> : vector<8x128xf32>
    %188 = tpu.matmul %187, %0, %cst_81 {dimension_numbers = #tpu.dot_dimension_numbers<[1], [0], [0], [1], [0, 0, 1, 1], [], []>} : vector<8x128xbf16>, vector<128x128xbf16>, vector<8x128xf32> -> vector<8x128xf32>
    %189 = math.tanh %188 : vector<8x128xf32>
    %190 = arith.truncf %189 : vector<8x128xf32> to vector<8x128xbf16>
    %c27_i32 = arith.constant 27 : i32
    %191 = arith.index_cast %c27_i32 : i32 to index
    %c0_82 = arith.constant 0 : index
    %c0_83 = arith.constant 0 : index
    %192 = vector.load %arg0[%191, %c0_82, %c0_83] : memref<28x8x128xbf16, #tpu.memory_space<vmem>>, vector<1x8x128xbf16>
    %193 = vector.shape_cast %192 : vector<1x8x128xbf16> to vector<8x128xbf16>
    %194 = arith.addf %193, %190 : vector<8x128xbf16>
    %cst_84 = arith.constant dense<0.000000e+00> : vector<8x128xf32>
    %195 = tpu.matmul %194, %0, %cst_84 {dimension_numbers = #tpu.dot_dimension_numbers<[1], [0], [0], [1], [0, 0, 1, 1], [], []>} : vector<8x128xbf16>, vector<128x128xbf16>, vector<8x128xf32> -> vector<8x128xf32>
    %196 = math.tanh %195 : vector<8x128xf32>
    %197 = arith.truncf %196 : vector<8x128xf32> to vector<8x128xbf16>
    %c28_i32 = arith.constant 28 : i32
    %c0_85 = arith.constant 0 : index
    %c0_86 = arith.constant 0 : index
    %198 = vector.load %arg2[%c0_85, %c0_86] : memref<128x10xbf16, #tpu.memory_space<vmem>>, vector<128x10xbf16>
    %cst_87 = arith.constant dense<0.000000e+00> : vector<8x10xf32>
    %199 = tpu.matmul %197, %198, %cst_87 {dimension_numbers = #tpu.dot_dimension_numbers<[1], [0], [0], [1], [0, 0, 1, 1], [], []>} : vector<8x128xbf16>, vector<128x10xbf16>, vector<8x10xf32> -> vector<8x10xf32>
    %c0_88 = arith.constant 0 : index
    %c0_89 = arith.constant 0 : index
    %200 = vector.load %arg3[%c0_88, %c0_89] : memref<1x10xf32, #tpu.memory_space<vmem>>, vector<1x10xf32>
    %201 = vector.broadcast %200 : vector<1x10xf32> to vector<8x10xf32>
    %202 = arith.addf %199, %201 : vector<8x10xf32>
    %cst_90 = arith.constant dense<0xFF800000> : vector<8xf32>
    %203 = vector.multi_reduction <maximumf>, %202, %cst_90 [1] : vector<8x10xf32> to vector<8xf32>
    %204 = vector.shape_cast %203 : vector<8xf32> to vector<8x1xf32>
    %205 = vector.broadcast %204 : vector<8x1xf32> to vector<8x10xf32>
    %206 = arith.subf %202, %205 : vector<8x10xf32>
    %207 = math.exp %206 : vector<8x10xf32>
    %cst_91 = arith.constant dense<0.000000e+00> : vector<8xf32>
    %208 = vector.multi_reduction <add>, %207, %cst_91 [1] : vector<8x10xf32> to vector<8xf32>
    %209 = vector.shape_cast %208 : vector<8xf32> to vector<8x1xf32>
    %210 = math.log %209 : vector<8x1xf32>
    %211 = vector.broadcast %210 : vector<8x1xf32> to vector<8x10xf32>
    %212 = arith.subf %206, %211 : vector<8x10xf32>
    %c0_92 = arith.constant 0 : index
    %c0_93 = arith.constant 0 : index
    %213 = vector.load %arg4[%c0_92, %c0_93] : memref<8x10xf32, #tpu.memory_space<vmem>>, vector<8x10xf32>
    tpu.vector_store %arg4[%c0_92, %c0_93], %212 {strides = array<i32>} : memref<8x10xf32, #tpu.memory_space<vmem>>, vector<8x10xf32>,
    return
  }
}

</mosaic_0001>

<llo_original>
// kernel: tpu_custom_call.1
$region0: #{tpu_custom_call.1}
  #allocation0 [shape = 'u32[]', space=smem, size = 0x4, offset = 0x4, fixed_abs, tag = 'smem constant byte address 0x4 - core index']
  #allocation1 [shape = 'u32[144,128]{1,0:T(1,128)}', space=vmem, size = 0x12000, scoped, tag = 'internal scratch']
  %s0 = inlined_call_operand.hbm [shape: bf16[28,8,128], index: 0, kind: input, shape index: {}]
  %s1 = inlined_call_operand.vmem [shape: bf16[128,128], index: 1, kind: input, shape index: {}]
  %s2 = inlined_call_operand.vmem [shape: bf16[128,10], index: 2, kind: input, shape index: {}]
  %s3 = inlined_call_operand.vmem [shape: f32[1,10], index: 3, kind: input, shape index: {}]
  %s4 = inlined_call_operand.hbm [shape: f32[8,10], index: 4, kind: output, shape index: {}]
  %s5 = sld [smem:[#allocation0]]
  $region30: #{tpu_custom_call.1} parent=0
    _
  %s7 = ssub.s32 1, %s5
  %s8 = scalar_select 0, %s7, %s5
  $region1: #{tpu_custom_call.1} parent=0
    #allocation2 [shape = 'u8[57344]{0}', space=vmem, size = 0xe000, scoped, tag = 'input window, operand 0, single buffered']
    #allocation3 [shape = 's32[1]{0}', space=sflag, size = 0x4, scoped, tag = 'scoped memory for tpu_custom_call.1']
    #allocation4 [shape = 's32[1]{0}', space=sflag, size = 0x4, scoped, tag = 'scoped memory for tpu_custom_call.1']
    #allocation5 [shape = 'u8[4096]{0}', space=vmem, size = 0x1000, scoped, tag = 'output window, operand 0, single buffered']
    %9 = vsyncpa [#allocation3], 0
    %10 = vsyncpa [#allocation4], 0
    // Predicated region
    $region2: #{tpu_custom_call.1} parent=1 // pred_check
      _
    $region3: #{tpu_custom_call.1} parent=1 // pred_check_branch
      %12 = sbr.rel (0) target = $region5
    $region4: #{tpu_custom_call.1} parent=1 // pred_region
      %s14 = ssub.s32 1792, 1792
      %15 = vsyncadd [#allocation3], %s14
      %s16 = sshll.u32 [#allocation2], 4
      %s17 = int_to_ptr.vmem [resolvable:$true] %s16
      %22 = dma.hbm_to_vmem [thread:$0]  %s0, 1792, %s17, [#allocation3], 64, 64, 4
    $region5: #{tpu_custom_call.1} parent=1 // pred_fallthru
      _
    // Predicated region
    $region6: #{tpu_custom_call.1} parent=1 // pred_check
      _
    $region7: #{tpu_custom_call.1} parent=1 // pred_check_branch
      %24 = sbr.rel (0) target = $region9
    $region8: #{tpu_custom_call.1} parent=1 // pred_region
      _
    $region9: #{tpu_custom_call.1} parent=1 // pred_fallthru
      _
    // Predicated region
    $region10: #{tpu_custom_call.1} parent=1 // pred_check
      _
    $region11: #{tpu_custom_call.1} parent=1 // pred_check_branch
      %26 = sbr.rel (0) target = $region13
    $region12: #{tpu_custom_call.1} parent=1 // pred_region
      _
    $region13: #{tpu_custom_call.1} parent=1 // pred_fallthru
      _
    // Predicated region
    $region14: #{tpu_custom_call.1} parent=1 // pred_check
      _
    $region15: #{tpu_custom_call.1} parent=1 // pred_check_branch
      %28 = sbr.rel (0) target = $region17
    $region16: #{tpu_custom_call.1} parent=1 // pred_region
      _
    $region17: #{tpu_custom_call.1} parent=1 // pred_fallthru
      _
    // Predicated region
    $region18: #{tpu_custom_call.1} parent=1 // pred_check
      _
    $region19: #{tpu_custom_call.1} parent=1 // pred_check_branch
      %30 = sbr.rel (0) target = $region21
    $region20: #{tpu_custom_call.1} parent=1 // pred_region
      %31 = dma.done [#allocation3], 1792
    $region21: #{tpu_custom_call.1} parent=1 // pred_fallthru
      _
    %v33 = vld [vmem:[%s1] sm:$0xf]
    %v34 = vld [vmem:[%s1 + $0x4] sm:$0xf]
    %v35 = vld [vmem:[%s1 + $0x8] sm:$0xf]
    %v36 = vld [vmem:[%s1 + $0xc] sm:$0xf]
    %v37 = vld [vmem:[%s1 + $0x10] sm:$0xf]
    %v38 = vld [vmem:[%s1 + $0x14] sm:$0xf]
    %v39 = vld [vmem:[%s1 + $0x18] sm:$0xf]
    %v40 = vld [vmem:[%s1 + $0x1c] sm:$0xf]
    %v41 = vld [vmem:[%s1 + $0x20] sm:$0xf]
    %v42 = vld [vmem:[%s1 + $0x24] sm:$0xf]
    %v43 = vld [vmem:[%s1 + $0x28] sm:$0xf]
    %v44 = vld [vmem:[%s1 + $0x2c] sm:$0xf]
    %v45 = vld [vmem:[%s1 + $0x30] sm:$0xf]
    %v46 = vld [vmem:[%s1 + $0x34] sm:$0xf]
    %v47 = vld [vmem:[%s1 + $0x38] sm:$0xf]
    %v48 = vld [vmem:[%s1 + $0x3c] sm:$0xf]
    %v49 = vld [vmem:[#allocation2] sm:$0xf]
    %v50 = vadd.bf16 %v49, 0
    %v67 = vunpack.c.l.b16 %v33
    %v68 = vunpack.c.l.b16 %v34
    %v69 = vunpack.c.l.b16 %v35
    %v70 = vunpack.c.l.b16 %v36
    %v71 = vunpack.c.l.b16 %v37
    %v72 = vunpack.c.l.b16 %v38
    %v73 = vunpack.c.l.b16 %v39
    %v74 = vunpack.c.l.b16 %v40
    %v75 = vunpack.c.l.b16 %v41
    %v76 = vunpack.c.l.b16 %v42
    %v77 = vunpack.c.l.b16 %v43
    %v78 = vunpack.c.l.b16 %v44
    %v79 = vunpack.c.l.b16 %v45
    %v80 = vunpack.c.l.b16 %v46
    %v81 = vunpack.c.l.b16 %v47
    %v82 = vunpack.c.l.b16 %v48
    %v83 = vpack.c.b16 %v68, %v67
    %v84 = vpack.c.b16 %v70, %v69
    %v85 = vpack.c.b16 %v72, %v71
    %v86 = vpack.c.b16 %v74, %v73
    %v87 = vpack.c.b16 %v76, %v75
    %v88 = vpack.c.b16 %v78, %v77
    %v89 = vpack.c.b16 %v80, %v79
    %v90 = vpack.c.b16 %v82, %v81
    %99 = vmatprep.subr.bf16.mxu0 0
    %100 = vmatpush1.bf16.msra.mxu0 %v90
    %101 = vmatprep.subr.bf16.mxu0 0
    %102 = vmatpush1.bf16.msra.mxu0 %v89
    %103 = vmatprep.subr.bf16.mxu0 0
    %104 = vmatpush1.bf16.msra.mxu0 %v88
    %105 = vmatprep.subr.bf16.mxu0 0
    %106 = vmatpush1.bf16.msra.mxu0 %v87
    %107 = vmatprep.subr.bf16.mxu0 0
    %108 = vmatpush1.bf16.msra.mxu0 %v86
    %109 = vmatprep.subr.bf16.mxu0 0
    %110 = vmatpush1.bf16.msra.mxu0 %v85
    %111 = vmatprep.subr.bf16.mxu0 0
    %112 = vmatpush1.bf16.msra.mxu0 %v84
    %113 = vmatprep.subr.bf16.mxu0 0
    %114 = vmatpush1.bf16.msra.mxu0 %v83
    %115 = vmatprep.subr.bf16.mxu0 0
    %116 = vmatpush2.bf16.msra.mxu0 0
    %117 = vmatprep.subr.bf16.mxu0 0
    %118 = vmatpush2.bf16.msra.mxu0 0
    %119 = vmatprep.subr.bf16.mxu0 0
    %120 = vmatpush2.bf16.msra.mxu0 0
    %121 = vmatprep.subr.bf16.mxu0 0
    %122 = vmatpush2.bf16.msra.mxu0 0
    %123 = vmatprep.subr.bf16.mxu0 0
    %124 = vmatpush2.bf16.msra.mxu0 0
    %125 = vmatprep.subr.bf16.mxu0 0
    %126 = vmatpush2.bf16.msra.mxu0 0
    %127 = vmatprep.subr.bf16.mxu0 0
    %128 = vmatpush2.bf16.msra.mxu0 0
    %129 = vmatprep.subr.bf16.mxu0 0
    %130 = vmatpush2.bf16.msra.mxu0 0
    %131 = vmatprep.mubr.bf16.mxu0 0
    %132 = vmatmul.mubr.bf16.gmra.mxu0 %v50
    %v133 = vpop.f32.mrf.mxu0
    %v134 = vadd.f32 0.0, %v133
    %v135 = vpop.f32.mrf.mxu0
    %v136 = vpop.f32.mrf.mxu0
    %v137 = vpop.f32.mrf.mxu0
    %138 = vdwg.mxu0
    %v139 = vtanh.pop %v134
    %v140 = vpack.c.bf16 %v139, %v139
    %s141 = scalar_lea.vmem [#allocation2], 4
    %v142 = vld [vmem:[%s141] sm:$0xf]
    %v143 = vadd.bf16 %v142, %v140
    %144 = vmatprep.subr.bf16.mxu0 0
    %145 = vmatpush1.bf16.msra.mxu0 %v90
    %146 = vmatprep.subr.bf16.mxu0 0
    %147 = vmatpush1.bf16.msra.mxu0 %v89
    %148 = vmatprep.subr.bf16.mxu0 0
    %149 = vmatpush1.bf16.msra.mxu0 %v88
    %150 = vmatprep.subr.bf16.mxu0 0
    %151 = vmatpush1.bf16.msra.mxu0 %v87
    %152 = vmatprep.subr.bf16.mxu0 0
    %153 = vmatpush1.bf16.msra.mxu0 %v86
    %154 = vmatprep.subr.bf16.mxu0 0
    %155 = vmatpush1.bf16.msra.mxu0 %v85
    %156 = vmatprep.subr.bf16.mxu0 0
    %157 = vmatpush1.bf16.msra.mxu0 %v84
    %158 = vmatprep.subr.bf16.mxu0 0
    %159 = vmatpush1.bf16.msra.mxu0 %v83
    %160 = vmatprep.subr.bf16.mxu0 0
    %161 = vmatpush2.bf16.msra.mxu0 0
    %162 = vmatprep.subr.bf16.mxu0 0
    %163 = vmatpush2.bf16.msra.mxu0 0
    %164 = vmatprep.subr.bf16.mxu0 0
    %165 = vmatpush2.bf16.msra.mxu0 0
    %166 = vmatprep.subr.bf16.mxu0 0
    %167 = vmatpush2.bf16.msra.mxu0 0
    %168 = vmatprep.subr.bf16.mxu0 0
    %169 = vmatpush2.bf16.msra.mxu0 0
    %170 = vmatprep.subr.bf16.mxu0 0
    %171 = vmatpush2.bf16.msra.mxu0 0
    %172 = vmatprep.subr.bf16.mxu0 0
    %173 = vmatpush2.bf16.msra.mxu0 0
    %174 = vmatprep.subr.bf16.mxu0 0
    %175 = vmatpush2.bf16.msra.mxu0 0
    %176 = vmatprep.mubr.bf16.mxu0 0
    %177 = vmatmul.mubr.bf16.gmra.mxu0 %v143
    %v178 = vpop.f32.mrf.mxu0
    %v179 = vadd.f32 0.0, %v178
    %v180 = vpop.f32.mrf.mxu0
    %v181 = vpop.f32.mrf.mxu0
    %v182 = vpop.f32.mrf.mxu0
    %183 = vdwg.mxu0
    %v184 = vtanh.pop %v179
    %v185 = vpack.c.bf16 %v184, %v184
    %s186 = scalar_lea.vmem [#allocation2], 8
    %v187 = vld [vmem:[%s186] sm:$0xf]
    %v188 = vadd.bf16 %v187, %v185
    %189 = vmatprep.subr.bf16.mxu0 0
    %190 = vmatpush1.bf16.msra.mxu0 %v90
    %191 = vmatprep.subr.bf16.mxu0 0
    %192 = vmatpush1.bf16.msra.mxu0 %v89
    %193 = vmatprep.subr.bf16.mxu0 0
    %194 = vmatpush1.bf16.msra.mxu0 %v88
    %195 = vmatprep.subr.bf16.mxu0 0
    %196 = vmatpush1.bf16.msra.mxu0 %v87
    %197 = vmatprep.subr.bf16.mxu0 0
    %198 = vmatpush1.bf16.msra.mxu0 %v86
    %199 = vmatprep.subr.bf16.mxu0 0
    %200 = vmatpush1.bf16.msra.mxu0 %v85
    %201 = vmatprep.subr.bf16.mxu0 0
    %202 = vmatpush1.bf16.msra.mxu0 %v84
    %203 = vmatprep.subr.bf16.mxu0 0
    %204 = vmatpush1.bf16.msra.mxu0 %v83
    %205 = vmatprep.subr.bf16.mxu0 0
    %206 = vmatpush2.bf16.msra.mxu0 0
    %207 = vmatprep.subr.bf16.mxu0 0
    %208 = vmatpush2.bf16.msra.mxu0 0
    %209 = vmatprep.subr.bf16.mxu0 0
    %210 = vmatpush2.bf16.msra.mxu0 0
    %211 = vmatprep.subr.bf16.mxu0 0
    %212 = vmatpush2.bf16.msra.mxu0 0
    %213 = vmatprep.subr.bf16.mxu0 0
    %214 = vmatpush2.bf16.msra.mxu0 0
    %215 = vmatprep.subr.bf16.mxu0 0
    %216 = vmatpush2.bf16.msra.mxu0 0
    %217 = vmatprep.subr.bf16.mxu0 0
    %218 = vmatpush2.bf16.msra.mxu0 0
    %219 = vmatprep.subr.bf16.mxu0 0
    %220 = vmatpush2.bf16.msra.mxu0 0
    %221 = vmatprep.mubr.bf16.mxu0 0
    %222 = vmatmul.mubr.bf16.gmra.mxu0 %v188
    %v223 = vpop.f32.mrf.mxu0
    %v224 = vadd.f32 0.0, %v223
    %v225 = vpop.f32.mrf.mxu0
    %v226 = vpop.f32.mrf.mxu0
    %v227 = vpop.f32.mrf.mxu0
    %228 = vdwg.mxu0
    %v229 = vtanh.pop %v224
    %v230 = vpack.c.bf16 %v229, %v229
    %s231 = scalar_lea.vmem [#allocation2], 12
    %v232 = vld [vmem:[%s231] sm:$0xf]
    %v233 = vadd.bf16 %v232, %v230
    %234 = vmatprep.subr.bf16.mxu0 0
    %235 = vmatpush1.bf16.msra.mxu0 %v90
    %236 = vmatprep.subr.bf16.mxu0 0
    %237 = vmatpush1.bf16.msra.mxu0 %v89
    %238 = vmatprep.subr.bf16.mxu0 0
    %239 = vmatpush1.bf16.msra.mxu0 %v88
    %240 = vmatprep.subr.bf16.mxu0 0
    %241 = vmatpush1.bf16.msra.mxu0 %v87
    %242 = vmatprep.subr.bf16.mxu0 0
    %243 = vmatpush1.bf16.msra.mxu0 %v86
    %244 = vmatprep.subr.bf16.mxu0 0
    %245 = vmatpush1.bf16.msra.mxu0 %v85
    %246 = vmatprep.subr.bf16.mxu0 0
    %247 = vmatpush1.bf16.msra.mxu0 %v84
    %248 = vmatprep.subr.bf16.mxu0 0
    %249 = vmatpush1.bf16.msra.mxu0 %v83
    %250 = vmatprep.subr.bf16.mxu0 0
    %251 = vmatpush2.bf16.msra.mxu0 0
    %252 = vmatprep.subr.bf16.mxu0 0
    %253 = vmatpush2.bf16.msra.mxu0 0
    %254 = vmatprep.subr.bf16.mxu0 0
    %255 = vmatpush2.bf16.msra.mxu0 0
    %256 = vmatprep.subr.bf16.mxu0 0
    %257 = vmatpush2.bf16.msra.mxu0 0
    %258 = vmatprep.subr.bf16.mxu0 0
    %259 = vmatpush2.bf16.msra.mxu0 0
    %260 = vmatprep.subr.bf16.mxu0 0
    %261 = vmatpush2.bf16.msra.mxu0 0
    %262 = vmatprep.subr.bf16.mxu0 0
    %263 = vmatpush2.bf16.msra.mxu0 0
    %264 = vmatprep.subr.bf16.mxu0 0
    %265 = vmatpush2.bf16.msra.mxu0 0
    %266 = vmatprep.mubr.bf16.mxu0 0
    %267 = vmatmul.mubr.bf16.gmra.mxu0 %v233
    %v268 = vpop.f32.mrf.mxu0
    %v269 = vadd.f32 0.0, %v268
    %v270 = vpop.f32.mrf.mxu0
    %v271 = vpop.f32.mrf.mxu0
    %v272 = vpop.f32.mrf.mxu0
    %273 = vdwg.mxu0
    %v274 = vtanh.pop %v269
    %v275 = vpack.c.bf16 %v274, %v274
    %s276 = scalar_lea.vmem [#allocation2], 16
    %v277 = vld [vmem:[%s276] sm:$0xf]
    %v278 = vadd.bf16 %v277, %v275
    %279 = vmatprep.subr.bf16.mxu0 0
    %280 = vmatpush1.bf16.msra.mxu0 %v90
    %281 = vmatprep.subr.bf16.mxu0 0
    %282 = vmatpush1.bf16.msra.mxu0 %v89
    %283 = vmatprep.subr.bf16.mxu0 0
    %284 = vmatpush1.bf16.msra.mxu0 %v88
    %285 = vmatprep.subr.bf16.mxu0 0
    %286 = vmatpush1.bf16.msra.mxu0 %v87
    %287 = vmatprep.subr.bf16.mxu0 0
    %288 = vmatpush1.bf16.msra.mxu0 %v86
    %289 = vmatprep.subr.bf16.mxu0 0
    %290 = vmatpush1.bf16.msra.mxu0 %v85
    %291 = vmatprep.subr.bf16.mxu0 0
    %292 = vmatpush1.bf16.msra.mxu0 %v84
    %293 = vmatprep.subr.bf16.mxu0 0
    %294 = vmatpush1.bf16.msra.mxu0 %v83
    %295 = vmatprep.subr.bf16.mxu0 0
    %296 = vmatpush2.bf16.msra.mxu0 0
    %297 = vmatprep.subr.bf16.mxu0 0
    %298 = vmatpush2.bf16.msra.mxu0 0
    %299 = vmatprep.subr.bf16.mxu0 0
    %300 = vmatpush2.bf16.msra.mxu0 0
    %301 = vmatprep.subr.bf16.mxu0 0
    %302 = vmatpush2.bf16.msra.mxu0 0
    %303 = vmatprep.subr.bf16.mxu0 0
    %304 = vmatpush2.bf16.msra.mxu0 0
    %305 = vmatprep.subr.bf16.mxu0 0
    %306 = vmatpush2.bf16.msra.mxu0 0
    %307 = vmatprep.subr.bf16.mxu0 0
    %308 = vmatpush2.bf16.msra.mxu0 0
    %309 = vmatprep.subr.bf16.mxu0 0
    %310 = vmatpush2.bf16.msra.mxu0 0
    %311 = vmatprep.mubr.bf16.mxu0 0
    %312 = vmatmul.mubr.bf16.gmra.mxu0 %v278
    %v313 = vpop.f32.mrf.mxu0
    %v314 = vadd.f32 0.0, %v313
    %v315 = vpop.f32.mrf.mxu0
    %v316 = vpop.f32.mrf.mxu0
    %v317 = vpop.f32.mrf.mxu0
    %318 = vdwg.mxu0
    %v319 = vtanh.pop %v314
    %v320 = vpack.c.bf16 %v319, %v319
    %s321 = scalar_lea.vmem [#allocation2], 20
    %v322 = vld [vmem:[%s321] sm:$0xf]
    %v323 = vadd.bf16 %v322, %v320
    %324 = vmatprep.subr.bf16.mxu0 0
    %325 = vmatpush1.bf16.msra.mxu0 %v90
    %326 = vmatprep.subr.bf16.mxu0 0
    %327 = vmatpush1.bf16.msra.mxu0 %v89
    %328 = vmatprep.subr.bf16.mxu0 0
    %329 = vmatpush1.bf16.msra.mxu0 %v88
    %330 = vmatprep.subr.bf16.mxu0 0
    %331 = vmatpush1.bf16.msra.mxu0 %v87
    %332 = vmatprep.subr.bf16.mxu0 0
    %333 = vmatpush1.bf16.msra.mxu0 %v86
    %334 = vmatprep.subr.bf16.mxu0 0
    %335 = vmatpush1.bf16.msra.mxu0 %v85
    %336 = vmatprep.subr.bf16.mxu0 0
    %337 = vmatpush1.bf16.msra.mxu0 %v84
    %338 = vmatprep.subr.bf16.mxu0 0
    %339 = vmatpush1.bf16.msra.mxu0 %v83
    %340 = vmatprep.subr.bf16.mxu0 0
    %341 = vmatpush2.bf16.msra.mxu0 0
    %342 = vmatprep.subr.bf16.mxu0 0
    %343 = vmatpush2.bf16.msra.mxu0 0
    %344 = vmatprep.subr.bf16.mxu0 0
    %345 = vmatpush2.bf16.msra.mxu0 0
    %346 = vmatprep.subr.bf16.mxu0 0
    %347 = vmatpush2.bf16.msra.mxu0 0
    %348 = vmatprep.subr.bf16.mxu0 0
    %349 = vmatpush2.bf16.msra.mxu0 0
    %350 = vmatprep.subr.bf16.mxu0 0
    %351 = vmatpush2.bf16.msra.mxu0 0
    %352 = vmatprep.subr.bf16.mxu0 0
    %353 = vmatpush2.bf16.msra.mxu0 0
    %354 = vmatprep.subr.bf16.mxu0 0
    %355 = vmatpush2.bf16.msra.mxu0 0
    %356 = vmatprep.mubr.bf16.mxu0 0
    %357 = vmatmul.mubr.bf16.gmra.mxu0 %v323
    %v358 = vpop.f32.mrf.mxu0
    %v359 = vadd.f32 0.0, %v358
    %v360 = vpop.f32.mrf.mxu0
    %v361 = vpop.f32.mrf.mxu0
    %v362 = vpop.f32.mrf.mxu0
    %363 = vdwg.mxu0
    %v364 = vtanh.pop %v359
    %v365 = vpack.c.bf16 %v364, %v364
    %s366 = scalar_lea.vmem [#allocation2], 24
    %v367 = vld [vmem:[%s366] sm:$0xf]
    %v368 = vadd.bf16 %v367, %v365
    %369 = vmatprep.subr.bf16.mxu0 0
    %370 = vmatpush1.bf16.msra.mxu0 %v90
    %371 = vmatprep.subr.bf16.mxu0 0
    %372 = vmatpush1.bf16.msra.mxu0 %v89
    %373 = vmatprep.subr.bf16.mxu0 0
    %374 = vmatpush1.bf16.msra.mxu0 %v88
    %375 = vmatprep.subr.bf16.mxu0 0
    %376 = vmatpush1.bf16.msra.mxu0 %v87
    %377 = vmatprep.subr.bf16.mxu0 0
    %378 = vmatpush1.bf16.msra.mxu0 %v86
    %379 = vmatprep.subr.bf16.mxu0 0
    %380 = vmatpush1.bf16.msra.mxu0 %v85
    %381 = vmatprep.subr.bf16.mxu0 0
    %382 = vmatpush1.bf16.msra.mxu0 %v84
    %383 = vmatprep.subr.bf16.mxu0 0
    %384 = vmatpush1.bf16.msra.mxu0 %v83
    %385 = vmatprep.subr.bf16.mxu0 0
    %386 = vmatpush2.bf16.msra.mxu0 0
    %387 = vmatprep.subr.bf16.mxu0 0
    %388 = vmatpush2.bf16.msra.mxu0 0
    %389 = vmatprep.subr.bf16.mxu0 0
    %390 = vmatpush2.bf16.msra.mxu0 0
    %391 = vmatprep.subr.bf16.mxu0 0
    %392 = vmatpush2.bf16.msra.mxu0 0
    %393 = vmatprep.subr.bf16.mxu0 0
    %394 = vmatpush2.bf16.msra.mxu0 0
    %395 = vmatprep.subr.bf16.mxu0 0
    %396 = vmatpush2.bf16.msra.mxu0 0
    %397 = vmatprep.subr.bf16.mxu0 0
    %398 = vmatpush2.bf16.msra.mxu0 0
    %399 = vmatprep.subr.bf16.mxu0 0
    %400 = vmatpush2.bf16.msra.mxu0 0
    %401 = vmatprep.mubr.bf16.mxu0 0
    %402 = vmatmul.mubr.bf16.gmra.mxu0 %v368
    %v403 = vpop.f32.mrf.mxu0
    %v404 = vadd.f32 0.0, %v403
    %v405 = vpop.f32.mrf.mxu0
    %v406 = vpop.f32.mrf.mxu0
    %v407 = vpop.f32.mrf.mxu0
    %408 = vdwg.mxu0
    %v409 = vtanh.pop %v404
    %v410 = vpack.c.bf16 %v409, %v409
    %s411 = scalar_lea.vmem [#allocation2], 28
    %v412 = vld [vmem:[%s411] sm:$0xf]
    %v413 = vadd.bf16 %v412, %v410
    %414 = vmatprep.subr.bf16.mxu0 0
    %415 = vmatpush1.bf16.msra.mxu0 %v90
    %416 = vmatprep.subr.bf16.mxu0 0
    %417 = vmatpush1.bf16.msra.mxu0 %v89
    %418 = vmatprep.subr.bf16.mxu0 0
    %419 = vmatpush1.bf16.msra.mxu0 %v88
    %420 = vmatprep.subr.bf16.mxu0 0
    %421 = vmatpush1.bf16.msra.mxu0 %v87
    %422 = vmatprep.subr.bf16.mxu0 0
    %423 = vmatpush1.bf16.msra.mxu0 %v86
    %424 = vmatprep.subr.bf16.mxu0 0
    %425 = vmatpush1.bf16.msra.mxu0 %v85
    %426 = vmatprep.subr.bf16.mxu0 0
    %427 = vmatpush1.bf16.msra.mxu0 %v84
    %428 = vmatprep.subr.bf16.mxu0 0
    %429 = vmatpush1.bf16.msra.mxu0 %v83
    %430 = vmatprep.subr.bf16.mxu0 0
    %431 = vmatpush2.bf16.msra.mxu0 0
    %432 = vmatprep.subr.bf16.mxu0 0
    %433 = vmatpush2.bf16.msra.mxu0 0
    %434 = vmatprep.subr.bf16.mxu0 0
    %435 = vmatpush2.bf16.msra.mxu0 0
    %436 = vmatprep.subr.bf16.mxu0 0
    %437 = vmatpush2.bf16.msra.mxu0 0
    %438 = vmatprep.subr.bf16.mxu0 0
    %439 = vmatpush2.bf16.msra.mxu0 0
    %440 = vmatprep.subr.bf16.mxu0 0
    %441 = vmatpush2.bf16.msra.mxu0 0
    %442 = vmatprep.subr.bf16.mxu0 0
    %443 = vmatpush2.bf16.msra.mxu0 0
    %444 = vmatprep.subr.bf16.mxu0 0
    %445 = vmatpush2.bf16.msra.mxu0 0
    %446 = vmatprep.mubr.bf16.mxu0 0
    %447 = vmatmul.mubr.bf16.gmra.mxu0 %v413
    %v448 = vpop.f32.mrf.mxu0
    %v449 = vadd.f32 0.0, %v448
    %v450 = vpop.f32.mrf.mxu0
    %v451 = vpop.f32.mrf.mxu0
    %v452 = vpop.f32.mrf.mxu0
    %453 = vdwg.mxu0
    %v454 = vtanh.pop %v449
    %v455 = vpack.c.bf16 %v454, %v454
    %s456 = scalar_lea.vmem [#allocation2], 32
    %v457 = vld [vmem:[%s456] sm:$0xf]
    %v458 = vadd.bf16 %v457, %v455
    %459 = vmatprep.subr.bf16.mxu0 0
    %460 = vmatpush1.bf16.msra.mxu0 %v90
    %461 = vmatprep.subr.bf16.mxu0 0
    %462 = vmatpush1.bf16.msra.mxu0 %v89
    %463 = vmatprep.subr.bf16.mxu0 0
    %464 = vmatpush1.bf16.msra.mxu0 %v88
    %465 = vmatprep.subr.bf16.mxu0 0
    %466 = vmatpush1.bf16.msra.mxu0 %v87
    %467 = vmatprep.subr.bf16.mxu0 0
    %468 = vmatpush1.bf16.msra.mxu0 %v86
    %469 = vmatprep.subr.bf16.mxu0 0
    %470 = vmatpush1.bf16.msra.mxu0 %v85
    %471 = vmatprep.subr.bf16.mxu0 0
    %472 = vmatpush1.bf16.msra.mxu0 %v84
    %473 = vmatprep.subr.bf16.mxu0 0
    %474 = vmatpush1.bf16.msra.mxu0 %v83
    %475 = vmatprep.subr.bf16.mxu0 0
    %476 = vmatpush2.bf16.msra.mxu0 0
    %477 = vmatprep.subr.bf16.mxu0 0
    %478 = vmatpush2.bf16.msra.mxu0 0
    %479 = vmatprep.subr.bf16.mxu0 0
    %480 = vmatpush2.bf16.msra.mxu0 0
    %481 = vmatprep.subr.bf16.mxu0 0
    %482 = vmatpush2.bf16.msra.mxu0 0
    %483 = vmatprep.subr.bf16.mxu0 0
    %484 = vmatpush2.bf16.msra.mxu0 0
    %485 = vmatprep.subr.bf16.mxu0 0
    %486 = vmatpush2.bf16.msra.mxu0 0
    %487 = vmatprep.subr.bf16.mxu0 0
    %488 = vmatpush2.bf16.msra.mxu0 0
    %489 = vmatprep.subr.bf16.mxu0 0
    %490 = vmatpush2.bf16.msra.mxu0 0
    %491 = vmatprep.mubr.bf16.mxu0 0
    %492 = vmatmul.mubr.bf16.gmra.mxu0 %v458
    %v493 = vpop.f32.mrf.mxu0
    %v494 = vadd.f32 0.0, %v493
    %v495 = vpop.f32.mrf.mxu0
    %v496 = vpop.f32.mrf.mxu0
    %v497 = vpop.f32.mrf.mxu0
    %498 = vdwg.mxu0
    %v499 = vtanh.pop %v494
    %v500 = vpack.c.bf16 %v499, %v499
    %s501 = scalar_lea.vmem [#allocation2], 36
    %v502 = vld [vmem:[%s501] sm:$0xf]
    %v503 = vadd.bf16 %v502, %v500
    %504 = vmatprep.subr.bf16.mxu0 0
    %505 = vmatpush1.bf16.msra.mxu0 %v90
    %506 = vmatprep.subr.bf16.mxu0 0
    %507 = vmatpush1.bf16.msra.mxu0 %v89
    %508 = vmatprep.subr.bf16.mxu0 0
    %509 = vmatpush1.bf16.msra.mxu0 %v88
    %510 = vmatprep.subr.bf16.mxu0 0
    %511 = vmatpush1.bf16.msra.mxu0 %v87
    %512 = vmatprep.subr.bf16.mxu0 0
    %513 = vmatpush1.bf16.msra.mxu0 %v86
    %514 = vmatprep.subr.bf16.mxu0 0
    %515 = vmatpush1.bf16.msra.mxu0 %v85
    %516 = vmatprep.subr.bf16.mxu0 0
    %517 = vmatpush1.bf16.msra.mxu0 %v84
    %518 = vmatprep.subr.bf16.mxu0 0
    %519 = vmatpush1.bf16.msra.mxu0 %v83
    %520 = vmatprep.subr.bf16.mxu0 0
    %521 = vmatpush2.bf16.msra.mxu0 0
    %522 = vmatprep.subr.bf16.mxu0 0
    %523 = vmatpush2.bf16.msra.mxu0 0
    %524 = vmatprep.subr.bf16.mxu0 0
    %525 = vmatpush2.bf16.msra.mxu0 0
    %526 = vmatprep.subr.bf16.mxu0 0
    %527 = vmatpush2.bf16.msra.mxu0 0
    %528 = vmatprep.subr.bf16.mxu0 0
    %529 = vmatpush2.bf16.msra.mxu0 0
    %530 = vmatprep.subr.bf16.mxu0 0
    %531 = vmatpush2.bf16.msra.mxu0 0
    %532 = vmatprep.subr.bf16.mxu0 0
    %533 = vmatpush2.bf16.msra.mxu0 0
    %534 = vmatprep.subr.bf16.mxu0 0
    %535 = vmatpush2.bf16.msra.mxu0 0
    %536 = vmatprep.mubr.bf16.mxu0 0
    %537 = vmatmul.mubr.bf16.gmra.mxu0 %v503
    %v538 = vpop.f32.mrf.mxu0
    %v539 = vadd.f32 0.0, %v538
    %v540 = vpop.f32.mrf.mxu0
    %v541 = vpop.f32.mrf.mxu0
    %v542 = vpop.f32.mrf.mxu0
    %543 = vdwg.mxu0
    %v544 = vtanh.pop %v539
    %v545 = vpack.c.bf16 %v544, %v544
    %s546 = scalar_lea.vmem [#allocation2], 40
    %v547 = vld [vmem:[%s546] sm:$0xf]
    %v548 = vadd.bf16 %v547, %v545
    %549 = vmatprep.subr.bf16.mxu0 0
    %550 = vmatpush1.bf16.msra.mxu0 %v90
    %551 = vmatprep.subr.bf16.mxu0 0
    %552 = vmatpush1.bf16.msra.mxu0 %v89
    %553 = vmatprep.subr.bf16.mxu0 0
    %554 = vmatpush1.bf16.msra.mxu0 %v88
    %555 = vmatprep.subr.bf16.mxu0 0
    %556 = vmatpush1.bf16.msra.mxu0 %v87
    %557 = vmatprep.subr.bf16.mxu0 0
    %558 = vmatpush1.bf16.msra.mxu0 %v86
    %559 = vmatprep.subr.bf16.mxu0 0
    %560 = vmatpush1.bf16.msra.mxu0 %v85
    %561 = vmatprep.subr.bf16.mxu0 0
    %562 = vmatpush1.bf16.msra.mxu0 %v84
    %563 = vmatprep.subr.bf16.mxu0 0
    %564 = vmatpush1.bf16.msra.mxu0 %v83
    %565 = vmatprep.subr.bf16.mxu0 0
    %566 = vmatpush2.bf16.msra.mxu0 0
    %567 = vmatprep.subr.bf16.mxu0 0
    %568 = vmatpush2.bf16.msra.mxu0 0
    %569 = vmatprep.subr.bf16.mxu0 0
    %570 = vmatpush2.bf16.msra.mxu0 0
    %571 = vmatprep.subr.bf16.mxu0 0
    %572 = vmatpush2.bf16.msra.mxu0 0
    %573 = vmatprep.subr.bf16.mxu0 0
    %574 = vmatpush2.bf16.msra.mxu0 0
    %575 = vmatprep.subr.bf16.mxu0 0
    %576 = vmatpush2.bf16.msra.mxu0 0
    %577 = vmatprep.subr.bf16.mxu0 0
    %578 = vmatpush2.bf16.msra.mxu0 0
    %579 = vmatprep.subr.bf16.mxu0 0
    %580 = vmatpush2.bf16.msra.mxu0 0
    %581 = vmatprep.mubr.bf16.mxu0 0
    %582 = vmatmul.mubr.bf16.gmra.mxu0 %v548
    %v583 = vpop.f32.mrf.mxu0
    %v584 = vadd.f32 0.0, %v583
    %v585 = vpop.f32.mrf.mxu0
    %v586 = vpop.f32.mrf.mxu0
    %v587 = vpop.f32.mrf.mxu0
    %588 = vdwg.mxu0
    %v589 = vtanh.pop %v584
    %v590 = vpack.c.bf16 %v589, %v589
    %s591 = scalar_lea.vmem [#allocation2], 44
    %v592 = vld [vmem:[%s591] sm:$0xf]
    %v593 = vadd.bf16 %v592, %v590
    %594 = vmatprep.subr.bf16.mxu0 0
    %595 = vmatpush1.bf16.msra.mxu0 %v90
    %596 = vmatprep.subr.bf16.mxu0 0
    %597 = vmatpush1.bf16.msra.mxu0 %v89
    %598 = vmatprep.subr.bf16.mxu0 0
    %599 = vmatpush1.bf16.msra.mxu0 %v88
    %600 = vmatprep.subr.bf16.mxu0 0
    %601 = vmatpush1.bf16.msra.mxu0 %v87
    %602 = vmatprep.subr.bf16.mxu0 0
    %603 = vmatpush1.bf16.msra.mxu0 %v86
    %604 = vmatprep.subr.bf16.mxu0 0
    %605 = vmatpush1.bf16.msra.mxu0 %v85
    %606 = vmatprep.subr.bf16.mxu0 0
    %607 = vmatpush1.bf16.msra.mxu0 %v84
    %608 = vmatprep.subr.bf16.mxu0 0
    %609 = vmatpush1.bf16.msra.mxu0 %v83
    %610 = vmatprep.subr.bf16.mxu0 0
    %611 = vmatpush2.bf16.msra.mxu0 0
    %612 = vmatprep.subr.bf16.mxu0 0
    %613 = vmatpush2.bf16.msra.mxu0 0
    %614 = vmatprep.subr.bf16.mxu0 0
    %615 = vmatpush2.bf16.msra.mxu0 0
    %616 = vmatprep.subr.bf16.mxu0 0
    %617 = vmatpush2.bf16.msra.mxu0 0
    %618 = vmatprep.subr.bf16.mxu0 0
    %619 = vmatpush2.bf16.msra.mxu0 0
    %620 = vmatprep.subr.bf16.mxu0 0
    %621 = vmatpush2.bf16.msra.mxu0 0
    %622 = vmatprep.subr.bf16.mxu0 0
    %623 = vmatpush2.bf16.msra.mxu0 0
    %624 = vmatprep.subr.bf16.mxu0 0
    %625 = vmatpush2.bf16.msra.mxu0 0
    %626 = vmatprep.mubr.bf16.mxu0 0
    %627 = vmatmul.mubr.bf16.gmra.mxu0 %v593
    %v628 = vpop.f32.mrf.mxu0
    %v629 = vadd.f32 0.0, %v628
    %v630 = vpop.f32.mrf.mxu0
    %v631 = vpop.f32.mrf.mxu0
    %v632 = vpop.f32.mrf.mxu0
    %633 = vdwg.mxu0
    %v634 = vtanh.pop %v629
    %v635 = vpack.c.bf16 %v634, %v634
    %s636 = scalar_lea.vmem [#allocation2], 48
    %v637 = vld [vmem:[%s636] sm:$0xf]
    %v638 = vadd.bf16 %v637, %v635
    %639 = vmatprep.subr.bf16.mxu0 0
    %640 = vmatpush1.bf16.msra.mxu0 %v90
    %641 = vmatprep.subr.bf16.mxu0 0
    %642 = vmatpush1.bf16.msra.mxu0 %v89
    %643 = vmatprep.subr.bf16.mxu0 0
    %644 = vmatpush1.bf16.msra.mxu0 %v88
    %645 = vmatprep.subr.bf16.mxu0 0
    %646 = vmatpush1.bf16.msra.mxu0 %v87
    %647 = vmatprep.subr.bf16.mxu0 0
    %648 = vmatpush1.bf16.msra.mxu0 %v86
    %649 = vmatprep.subr.bf16.mxu0 0
    %650 = vmatpush1.bf16.msra.mxu0 %v85
    %651 = vmatprep.subr.bf16.mxu0 0
    %652 = vmatpush1.bf16.msra.mxu0 %v84
    %653 = vmatprep.subr.bf16.mxu0 0
    %654 = vmatpush1.bf16.msra.mxu0 %v83
    %655 = vmatprep.subr.bf16.mxu0 0
    %656 = vmatpush2.bf16.msra.mxu0 0
    %657 = vmatprep.subr.bf16.mxu0 0
    %658 = vmatpush2.bf16.msra.mxu0 0
    %659 = vmatprep.subr.bf16.mxu0 0
    %660 = vmatpush2.bf16.msra.mxu0 0
    %661 = vmatprep.subr.bf16.mxu0 0
    %662 = vmatpush2.bf16.msra.mxu0 0
    %663 = vmatprep.subr.bf16.mxu0 0
    %664 = vmatpush2.bf16.msra.mxu0 0
    %665 = vmatprep.subr.bf16.mxu0 0
    %666 = vmatpush2.bf16.msra.mxu0 0
    %667 = vmatprep.subr.bf16.mxu0 0
    %668 = vmatpush2.bf16.msra.mxu0 0
    %669 = vmatprep.subr.bf16.mxu0 0
    %670 = vmatpush2.bf16.msra.mxu0 0
    %671 = vmatprep.mubr.bf16.mxu0 0
    %672 = vmatmul.mubr.bf16.gmra.mxu0 %v638
    %v673 = vpop.f32.mrf.mxu0
    %v674 = vadd.f32 0.0, %v673
    %v675 = vpop.f32.mrf.mxu0
    %v676 = vpop.f32.mrf.mxu0
    %v677 = vpop.f32.mrf.mxu0
    %678 = vdwg.mxu0
    %v679 = vtanh.pop %v674
    %v680 = vpack.c.bf16 %v679, %v679
    %s681 = scalar_lea.vmem [#allocation2], 52
    %v682 = vld [vmem:[%s681] sm:$0xf]
    %v683 = vadd.bf16 %v682, %v680
    %684 = vmatprep.subr.bf16.mxu0 0
    %685 = vmatpush1.bf16.msra.mxu0 %v90
    %686 = vmatprep.subr.bf16.mxu0 0
    %687 = vmatpush1.bf16.msra.mxu0 %v89
    %688 = vmatprep.subr.bf16.mxu0 0
    %689 = vmatpush1.bf16.msra.mxu0 %v88
    %690 = vmatprep.subr.bf16.mxu0 0
    %691 = vmatpush1.bf16.msra.mxu0 %v87
    %692 = vmatprep.subr.bf16.mxu0 0
    %693 = vmatpush1.bf16.msra.mxu0 %v86
    %694 = vmatprep.subr.bf16.mxu0 0
    %695 = vmatpush1.bf16.msra.mxu0 %v85
    %696 = vmatprep.subr.bf16.mxu0 0
    %697 = vmatpush1.bf16.msra.mxu0 %v84
    %698 = vmatprep.subr.bf16.mxu0 0
    %699 = vmatpush1.bf16.msra.mxu0 %v83
    %700 = vmatprep.subr.bf16.mxu0 0
    %701 = vmatpush2.bf16.msra.mxu0 0
    %702 = vmatprep.subr.bf16.mxu0 0
    %703 = vmatpush2.bf16.msra.mxu0 0
    %704 = vmatprep.subr.bf16.mxu0 0
    %705 = vmatpush2.bf16.msra.mxu0 0
    %706 = vmatprep.subr.bf16.mxu0 0
    %707 = vmatpush2.bf16.msra.mxu0 0
    %708 = vmatprep.subr.bf16.mxu0 0
    %709 = vmatpush2.bf16.msra.mxu0 0
    %710 = vmatprep.subr.bf16.mxu0 0
    %711 = vmatpush2.bf16.msra.mxu0 0
    %712 = vmatprep.subr.bf16.mxu0 0
    %713 = vmatpush2.bf16.msra.mxu0 0
    %714 = vmatprep.subr.bf16.mxu0 0
    %715 = vmatpush2.bf16.msra.mxu0 0
    %716 = vmatprep.mubr.bf16.mxu0 0
    %717 = vmatmul.mubr.bf16.gmra.mxu0 %v683
    %v718 = vpop.f32.mrf.mxu0
    %v719 = vadd.f32 0.0, %v718
    %v720 = vpop.f32.mrf.mxu0
    %v721 = vpop.f32.mrf.mxu0
    %v722 = vpop.f32.mrf.mxu0
    %723 = vdwg.mxu0
    %v724 = vtanh.pop %v719
    %v725 = vpack.c.bf16 %v724, %v724
    %s726 = scalar_lea.vmem [#allocation2], 56
    %v727 = vld [vmem:[%s726] sm:$0xf]
    %v728 = vadd.bf16 %v727, %v725
    %729 = vmatprep.subr.bf16.mxu0 0
    %730 = vmatpush1.bf16.msra.mxu0 %v90
    %731 = vmatprep.subr.bf16.mxu0 0
    %732 = vmatpush1.bf16.msra.mxu0 %v89
    %733 = vmatprep.subr.bf16.mxu0 0
    %734 = vmatpush1.bf16.msra.mxu0 %v88
    %735 = vmatprep.subr.bf16.mxu0 0
    %736 = vmatpush1.bf16.msra.mxu0 %v87
    %737 = vmatprep.subr.bf16.mxu0 0
    %738 = vmatpush1.bf16.msra.mxu0 %v86
    %739 = vmatprep.subr.bf16.mxu0 0
    %740 = vmatpush1.bf16.msra.mxu0 %v85
    %741 = vmatprep.subr.bf16.mxu0 0
    %742 = vmatpush1.bf16.msra.mxu0 %v84
    %743 = vmatprep.subr.bf16.mxu0 0
    %744 = vmatpush1.bf16.msra.mxu0 %v83
    %745 = vmatprep.subr.bf16.mxu0 0
    %746 = vmatpush2.bf16.msra.mxu0 0
    %747 = vmatprep.subr.bf16.mxu0 0
    %748 = vmatpush2.bf16.msra.mxu0 0
    %749 = vmatprep.subr.bf16.mxu0 0
    %750 = vmatpush2.bf16.msra.mxu0 0
    %751 = vmatprep.subr.bf16.mxu0 0
    %752 = vmatpush2.bf16.msra.mxu0 0
    %753 = vmatprep.subr.bf16.mxu0 0
    %754 = vmatpush2.bf16.msra.mxu0 0
    %755 = vmatprep.subr.bf16.mxu0 0
    %756 = vmatpush2.bf16.msra.mxu0 0
    %757 = vmatprep.subr.bf16.mxu0 0
    %758 = vmatpush2.bf16.msra.mxu0 0
    %759 = vmatprep.subr.bf16.mxu0 0
    %760 = vmatpush2.bf16.msra.mxu0 0
    %761 = vmatprep.mubr.bf16.mxu0 0
    %762 = vmatmul.mubr.bf16.gmra.mxu0 %v728
    %v763 = vpop.f32.mrf.mxu0
    %v764 = vadd.f32 0.0, %v763
    %v765 = vpop.f32.mrf.mxu0
    %v766 = vpop.f32.mrf.mxu0
    %v767 = vpop.f32.mrf.mxu0
    %768 = vdwg.mxu0
    %v769 = vtanh.pop %v764
    %v770 = vpack.c.bf16 %v769, %v769
    %s771 = scalar_lea.vmem [#allocation2], 60
    %v772 = vld [vmem:[%s771] sm:$0xf]
    %v773 = vadd.bf16 %v772, %v770
    %774 = vmatprep.subr.bf16.mxu0 0
    %775 = vmatpush1.bf16.msra.mxu0 %v90
    %776 = vmatprep.subr.bf16.mxu0 0
    %777 = vmatpush1.bf16.msra.mxu0 %v89
    %778 = vmatprep.subr.bf16.mxu0 0
    %779 = vmatpush1.bf16.msra.mxu0 %v88
    %780 = vmatprep.subr.bf16.mxu0 0
    %781 = vmatpush1.bf16.msra.mxu0 %v87
    %782 = vmatprep.subr.bf16.mxu0 0
    %783 = vmatpush1.bf16.msra.mxu0 %v86
    %784 = vmatprep.subr.bf16.mxu0 0
    %785 = vmatpush1.bf16.msra.mxu0 %v85
    %786 = vmatprep.subr.bf16.mxu0 0
    %787 = vmatpush1.bf16.msra.mxu0 %v84
    %788 = vmatprep.subr.bf16.mxu0 0
    %789 = vmatpush1.bf16.msra.mxu0 %v83
    %790 = vmatprep.subr.bf16.mxu0 0
    %791 = vmatpush2.bf16.msra.mxu0 0
    %792 = vmatprep.subr.bf16.mxu0 0
    %793 = vmatpush2.bf16.msra.mxu0 0
    %794 = vmatprep.subr.bf16.mxu0 0
    %795 = vmatpush2.bf16.msra.mxu0 0
    %796 = vmatprep.subr.bf16.mxu0 0
    %797 = vmatpush2.bf16.msra.mxu0 0
    %798 = vmatprep.subr.bf16.mxu0 0
    %799 = vmatpush2.bf16.msra.mxu0 0
    %800 = vmatprep.subr.bf16.mxu0 0
    %801 = vmatpush2.bf16.msra.mxu0 0
    %802 = vmatprep.subr.bf16.mxu0 0
    %803 = vmatpush2.bf16.msra.mxu0 0
    %804 = vmatprep.subr.bf16.mxu0 0
    %805 = vmatpush2.bf16.msra.mxu0 0
    %806 = vmatprep.mubr.bf16.mxu0 0
    %807 = vmatmul.mubr.bf16.gmra.mxu0 %v773
    %v808 = vpop.f32.mrf.mxu0
    %v809 = vadd.f32 0.0, %v808
    %v810 = vpop.f32.mrf.mxu0
    %v811 = vpop.f32.mrf.mxu0
    %v812 = vpop.f32.mrf.mxu0
    %813 = vdwg.mxu0
    %v814 = vtanh.pop %v809
    %v815 = vpack.c.bf16 %v814, %v814
    %s816 = scalar_lea.vmem [#allocation2], 64
    %v817 = vld [vmem:[%s816] sm:$0xf]
    %v818 = vadd.bf16 %v817, %v815
    %819 = vmatprep.subr.bf16.mxu0 0
    %820 = vmatpush1.bf16.msra.mxu0 %v90
    %821 = vmatprep.subr.bf16.mxu0 0
    %822 = vmatpush1.bf16.msra.mxu0 %v89
    %823 = vmatprep.subr.bf16.mxu0 0
    %824 = vmatpush1.bf16.msra.mxu0 %v88
    %825 = vmatprep.subr.bf16.mxu0 0
    %826 = vmatpush1.bf16.msra.mxu0 %v87
    %827 = vmatprep.subr.bf16.mxu0 0
    %828 = vmatpush1.bf16.msra.mxu0 %v86
    %829 = vmatprep.subr.bf16.mxu0 0
    %830 = vmatpush1.bf16.msra.mxu0 %v85
    %831 = vmatprep.subr.bf16.mxu0 0
    %832 = vmatpush1.bf16.msra.mxu0 %v84
    %833 = vmatprep.subr.bf16.mxu0 0
    %834 = vmatpush1.bf16.msra.mxu0 %v83
    %835 = vmatprep.subr.bf16.mxu0 0
    %836 = vmatpush2.bf16.msra.mxu0 0
    %837 = vmatprep.subr.bf16.mxu0 0
    %838 = vmatpush2.bf16.msra.mxu0 0
    %839 = vmatprep.subr.bf16.mxu0 0
    %840 = vmatpush2.bf16.msra.mxu0 0
    %841 = vmatprep.subr.bf16.mxu0 0
    %842 = vmatpush2.bf16.msra.mxu0 0
    %843 = vmatprep.subr.bf16.mxu0 0
    %844 = vmatpush2.bf16.msra.mxu0 0
    %845 = vmatprep.subr.bf16.mxu0 0
    %846 = vmatpush2.bf16.msra.mxu0 0
    %847 = vmatprep.subr.bf16.mxu0 0
    %848 = vmatpush2.bf16.msra.mxu0 0
    %849 = vmatprep.subr.bf16.mxu0 0
    %850 = vmatpush2.bf16.msra.mxu0 0
    %851 = vmatprep.mubr.bf16.mxu0 0
    %852 = vmatmul.mubr.bf16.gmra.mxu0 %v818
    %v853 = vpop.f32.mrf.mxu0
    %v854 = vadd.f32 0.0, %v853
    %v855 = vpop.f32.mrf.mxu0
    %v856 = vpop.f32.mrf.mxu0
    %v857 = vpop.f32.mrf.mxu0
    %858 = vdwg.mxu0
    %v859 = vtanh.pop %v854
    %v860 = vpack.c.bf16 %v859, %v859
    %s861 = scalar_lea.vmem [#allocation2], 68
    %v862 = vld [vmem:[%s861] sm:$0xf]
    %v863 = vadd.bf16 %v862, %v860
    %864 = vmatprep.subr.bf16.mxu0 0
    %865 = vmatpush1.bf16.msra.mxu0 %v90
    %866 = vmatprep.subr.bf16.mxu0 0
    %867 = vmatpush1.bf16.msra.mxu0 %v89
    %868 = vmatprep.subr.bf16.mxu0 0
    %869 = vmatpush1.bf16.msra.mxu0 %v88
    %870 = vmatprep.subr.bf16.mxu0 0
    %871 = vmatpush1.bf16.msra.mxu0 %v87
    %872 = vmatprep.subr.bf16.mxu0 0
    %873 = vmatpush1.bf16.msra.mxu0 %v86
    %874 = vmatprep.subr.bf16.mxu0 0
    %875 = vmatpush1.bf16.msra.mxu0 %v85
    %876 = vmatprep.subr.bf16.mxu0 0
    %877 = vmatpush1.bf16.msra.mxu0 %v84
    %878 = vmatprep.subr.bf16.mxu0 0
    %879 = vmatpush1.bf16.msra.mxu0 %v83
    %880 = vmatprep.subr.bf16.mxu0 0
    %881 = vmatpush2.bf16.msra.mxu0 0
    %882 = vmatprep.subr.bf16.mxu0 0
    %883 = vmatpush2.bf16.msra.mxu0 0
    %884 = vmatprep.subr.bf16.mxu0 0
    %885 = vmatpush2.bf16.msra.mxu0 0
    %886 = vmatprep.subr.bf16.mxu0 0
    %887 = vmatpush2.bf16.msra.mxu0 0
    %888 = vmatprep.subr.bf16.mxu0 0
    %889 = vmatpush2.bf16.msra.mxu0 0
    %890 = vmatprep.subr.bf16.mxu0 0
    %891 = vmatpush2.bf16.msra.mxu0 0
    %892 = vmatprep.subr.bf16.mxu0 0
    %893 = vmatpush2.bf16.msra.mxu0 0
    %894 = vmatprep.subr.bf16.mxu0 0
    %895 = vmatpush2.bf16.msra.mxu0 0
    %896 = vmatprep.mubr.bf16.mxu0 0
    %897 = vmatmul.mubr.bf16.gmra.mxu0 %v863
    %v898 = vpop.f32.mrf.mxu0
    %v899 = vadd.f32 0.0, %v898
    %v900 = vpop.f32.mrf.mxu0
    %v901 = vpop.f32.mrf.mxu0
    %v902 = vpop.f32.mrf.mxu0
    %903 = vdwg.mxu0
    %v904 = vtanh.pop %v899
    %v905 = vpack.c.bf16 %v904, %v904
    %s906 = scalar_lea.vmem [#allocation2], 72
    %v907 = vld [vmem:[%s906] sm:$0xf]
    %v908 = vadd.bf16 %v907, %v905
    %909 = vmatprep.subr.bf16.mxu0 0
    %910 = vmatpush1.bf16.msra.mxu0 %v90
    %911 = vmatprep.subr.bf16.mxu0 0
    %912 = vmatpush1.bf16.msra.mxu0 %v89
    %913 = vmatprep.subr.bf16.mxu0 0
    %914 = vmatpush1.bf16.msra.mxu0 %v88
    %915 = vmatprep.subr.bf16.mxu0 0
    %916 = vmatpush1.bf16.msra.mxu0 %v87
    %917 = vmatprep.subr.bf16.mxu0 0
    %918 = vmatpush1.bf16.msra.mxu0 %v86
    %919 = vmatprep.subr.bf16.mxu0 0
    %920 = vmatpush1.bf16.msra.mxu0 %v85
    %921 = vmatprep.subr.bf16.mxu0 0
    %922 = vmatpush1.bf16.msra.mxu0 %v84
    %923 = vmatprep.subr.bf16.mxu0 0
    %924 = vmatpush1.bf16.msra.mxu0 %v83
    %925 = vmatprep.subr.bf16.mxu0 0
    %926 = vmatpush2.bf16.msra.mxu0 0
    %927 = vmatprep.subr.bf16.mxu0 0
    %928 = vmatpush2.bf16.msra.mxu0 0
    %929 = vmatprep.subr.bf16.mxu0 0
    %930 = vmatpush2.bf16.msra.mxu0 0
    %931 = vmatprep.subr.bf16.mxu0 0
    %932 = vmatpush2.bf16.msra.mxu0 0
    %933 = vmatprep.subr.bf16.mxu0 0
    %934 = vmatpush2.bf16.msra.mxu0 0
    %935 = vmatprep.subr.bf16.mxu0 0
    %936 = vmatpush2.bf16.msra.mxu0 0
    %937 = vmatprep.subr.bf16.mxu0 0
    %938 = vmatpush2.bf16.msra.mxu0 0
    %939 = vmatprep.subr.bf16.mxu0 0
    %940 = vmatpush2.bf16.msra.mxu0 0
    %941 = vmatprep.mubr.bf16.mxu0 0
    %942 = vmatmul.mubr.bf16.gmra.mxu0 %v908
    %v943 = vpop.f32.mrf.mxu0
    %v944 = vadd.f32 0.0, %v943
    %v945 = vpop.f32.mrf.mxu0
    %v946 = vpop.f32.mrf.mxu0
    %v947 = vpop.f32.mrf.mxu0
    %948 = vdwg.mxu0
    %v949 = vtanh.pop %v944
    %v950 = vpack.c.bf16 %v949, %v949
    %s951 = scalar_lea.vmem [#allocation2], 76
    %v952 = vld [vmem:[%s951] sm:$0xf]
    %v953 = vadd.bf16 %v952, %v950
    %954 = vmatprep.subr.bf16.mxu0 0
    %955 = vmatpush1.bf16.msra.mxu0 %v90
    %956 = vmatprep.subr.bf16.mxu0 0
    %957 = vmatpush1.bf16.msra.mxu0 %v89
    %958 = vmatprep.subr.bf16.mxu0 0
    %959 = vmatpush1.bf16.msra.mxu0 %v88
    %960 = vmatprep.subr.bf16.mxu0 0
    %961 = vmatpush1.bf16.msra.mxu0 %v87
    %962 = vmatprep.subr.bf16.mxu0 0
    %963 = vmatpush1.bf16.msra.mxu0 %v86
    %964 = vmatprep.subr.bf16.mxu0 0
    %965 = vmatpush1.bf16.msra.mxu0 %v85
    %966 = vmatprep.subr.bf16.mxu0 0
    %967 = vmatpush1.bf16.msra.mxu0 %v84
    %968 = vmatprep.subr.bf16.mxu0 0
    %969 = vmatpush1.bf16.msra.mxu0 %v83
    %970 = vmatprep.subr.bf16.mxu0 0
    %971 = vmatpush2.bf16.msra.mxu0 0
    %972 = vmatprep.subr.bf16.mxu0 0
    %973 = vmatpush2.bf16.msra.mxu0 0
    %974 = vmatprep.subr.bf16.mxu0 0
    %975 = vmatpush2.bf16.msra.mxu0 0
    %976 = vmatprep.subr.bf16.mxu0 0
    %977 = vmatpush2.bf16.msra.mxu0 0
    %978 = vmatprep.subr.bf16.mxu0 0
    %979 = vmatpush2.bf16.msra.mxu0 0
    %980 = vmatprep.subr.bf16.mxu0 0
    %981 = vmatpush2.bf16.msra.mxu0 0
    %982 = vmatprep.subr.bf16.mxu0 0
    %983 = vmatpush2.bf16.msra.mxu0 0
    %984 = vmatprep.subr.bf16.mxu0 0
    %985 = vmatpush2.bf16.msra.mxu0 0
    %986 = vmatprep.mubr.bf16.mxu0 0
    %987 = vmatmul.mubr.bf16.gmra.mxu0 %v953
    %v988 = vpop.f32.mrf.mxu0
    %v989 = vadd.f32 0.0, %v988
    %v990 = vpop.f32.mrf.mxu0
    %v991 = vpop.f32.mrf.mxu0
    %v992 = vpop.f32.mrf.mxu0
    %993 = vdwg.mxu0
    %v994 = vtanh.pop %v989
    %v995 = vpack.c.bf16 %v994, %v994
    %s996 = scalar_lea.vmem [#allocation2], 80
    %v997 = vld [vmem:[%s996] sm:$0xf]
    %v998 = vadd.bf16 %v997, %v995
    %999 = vmatprep.subr.bf16.mxu0 0
    %1000 = vmatpush1.bf16.msra.mxu0 %v90
    %1001 = vmatprep.subr.bf16.mxu0 0
    %1002 = vmatpush1.bf16.msra.mxu0 %v89
    %1003 = vmatprep.subr.bf16.mxu0 0
    %1004 = vmatpush1.bf16.msra.mxu0 %v88
    %1005 = vmatprep.subr.bf16.mxu0 0
    %1006 = vmatpush1.bf16.msra.mxu0 %v87
    %1007 = vmatprep.subr.bf16.mxu0 0
    %1008 = vmatpush1.bf16.msra.mxu0 %v86
    %1009 = vmatprep.subr.bf16.mxu0 0
    %1010 = vmatpush1.bf16.msra.mxu0 %v85
    %1011 = vmatprep.subr.bf16.mxu0 0
    %1012 = vmatpush1.bf16.msra.mxu0 %v84
    %1013 = vmatprep.subr.bf16.mxu0 0
    %1014 = vmatpush1.bf16.msra.mxu0 %v83
    %1015 = vmatprep.subr.bf16.mxu0 0
    %1016 = vmatpush2.bf16.msra.mxu0 0
    %1017 = vmatprep.subr.bf16.mxu0 0
    %1018 = vmatpush2.bf16.msra.mxu0 0
    %1019 = vmatprep.subr.bf16.mxu0 0
    %1020 = vmatpush2.bf16.msra.mxu0 0
    %1021 = vmatprep.subr.bf16.mxu0 0
    %1022 = vmatpush2.bf16.msra.mxu0 0
    %1023 = vmatprep.subr.bf16.mxu0 0
    %1024 = vmatpush2.bf16.msra.mxu0 0
    %1025 = vmatprep.subr.bf16.mxu0 0
    %1026 = vmatpush2.bf16.msra.mxu0 0
    %1027 = vmatprep.subr.bf16.mxu0 0
    %1028 = vmatpush2.bf16.msra.mxu0 0
    %1029 = vmatprep.subr.bf16.mxu0 0
    %1030 = vmatpush2.bf16.msra.mxu0 0
    %1031 = vmatprep.mubr.bf16.mxu0 0
    %1032 = vmatmul.mubr.bf16.gmra.mxu0 %v998
    %v1033 = vpop.f32.mrf.mxu0
    %v1034 = vadd.f32 0.0, %v1033
    %v1035 = vpop.f32.mrf.mxu0
    %v1036 = vpop.f32.mrf.mxu0
    %v1037 = vpop.f32.mrf.mxu0
    %1038 = vdwg.mxu0
    %v1039 = vtanh.pop %v1034
    %v1040 = vpack.c.bf16 %v1039, %v1039
    %s1041 = scalar_lea.vmem [#allocation2], 84
    %v1042 = vld [vmem:[%s1041] sm:$0xf]
    %v1043 = vadd.bf16 %v1042, %v1040
    %1044 = vmatprep.subr.bf16.mxu0 0
    %1045 = vmatpush1.bf16.msra.mxu0 %v90
    %1046 = vmatprep.subr.bf16.mxu0 0
    %1047 = vmatpush1.bf16.msra.mxu0 %v89
    %1048 = vmatprep.subr.bf16.mxu0 0
    %1049 = vmatpush1.bf16.msra.mxu0 %v88
    %1050 = vmatprep.subr.bf16.mxu0 0
    %1051 = vmatpush1.bf16.msra.mxu0 %v87
    %1052 = vmatprep.subr.bf16.mxu0 0
    %1053 = vmatpush1.bf16.msra.mxu0 %v86
    %1054 = vmatprep.subr.bf16.mxu0 0
    %1055 = vmatpush1.bf16.msra.mxu0 %v85
    %1056 = vmatprep.subr.bf16.mxu0 0
    %1057 = vmatpush1.bf16.msra.mxu0 %v84
    %1058 = vmatprep.subr.bf16.mxu0 0
    %1059 = vmatpush1.bf16.msra.mxu0 %v83
    %1060 = vmatprep.subr.bf16.mxu0 0
    %1061 = vmatpush2.bf16.msra.mxu0 0
    %1062 = vmatprep.subr.bf16.mxu0 0
    %1063 = vmatpush2.bf16.msra.mxu0 0
    %1064 = vmatprep.subr.bf16.mxu0 0
    %1065 = vmatpush2.bf16.msra.mxu0 0
    %1066 = vmatprep.subr.bf16.mxu0 0
    %1067 = vmatpush2.bf16.msra.mxu0 0
    %1068 = vmatprep.subr.bf16.mxu0 0
    %1069 = vmatpush2.bf16.msra.mxu0 0
    %1070 = vmatprep.subr.bf16.mxu0 0
    %1071 = vmatpush2.bf16.msra.mxu0 0
    %1072 = vmatprep.subr.bf16.mxu0 0
    %1073 = vmatpush2.bf16.msra.mxu0 0
    %1074 = vmatprep.subr.bf16.mxu0 0
    %1075 = vmatpush2.bf16.msra.mxu0 0
    %1076 = vmatprep.mubr.bf16.mxu0 0
    %1077 = vmatmul.mubr.bf16.gmra.mxu0 %v1043
    %v1078 = vpop.f32.mrf.mxu0
    %v1079 = vadd.f32 0.0, %v1078
    %v1080 = vpop.f32.mrf.mxu0
    %v1081 = vpop.f32.mrf.mxu0
    %v1082 = vpop.f32.mrf.mxu0
    %1083 = vdwg.mxu0
    %v1084 = vtanh.pop %v1079
    %v1085 = vpack.c.bf16 %v1084, %v1084
    %s1086 = scalar_lea.vmem [#allocation2], 88
    %v1087 = vld [vmem:[%s1086] sm:$0xf]
    %v1088 = vadd.bf16 %v1087, %v1085
    %1089 = vmatprep.subr.bf16.mxu0 0
    %1090 = vmatpush1.bf16.msra.mxu0 %v90
    %1091 = vmatprep.subr.bf16.mxu0 0
    %1092 = vmatpush1.bf16.msra.mxu0 %v89
    %1093 = vmatprep.subr.bf16.mxu0 0
    %1094 = vmatpush1.bf16.msra.mxu0 %v88
    %1095 = vmatprep.subr.bf16.mxu0 0
    %1096 = vmatpush1.bf16.msra.mxu0 %v87
    %1097 = vmatprep.subr.bf16.mxu0 0
    %1098 = vmatpush1.bf16.msra.mxu0 %v86
    %1099 = vmatprep.subr.bf16.mxu0 0
    %1100 = vmatpush1.bf16.msra.mxu0 %v85
    %1101 = vmatprep.subr.bf16.mxu0 0
    %1102 = vmatpush1.bf16.msra.mxu0 %v84
    %1103 = vmatprep.subr.bf16.mxu0 0
    %1104 = vmatpush1.bf16.msra.mxu0 %v83
    %1105 = vmatprep.subr.bf16.mxu0 0
    %1106 = vmatpush2.bf16.msra.mxu0 0
    %1107 = vmatprep.subr.bf16.mxu0 0
    %1108 = vmatpush2.bf16.msra.mxu0 0
    %1109 = vmatprep.subr.bf16.mxu0 0
    %1110 = vmatpush2.bf16.msra.mxu0 0
    %1111 = vmatprep.subr.bf16.mxu0 0
    %1112 = vmatpush2.bf16.msra.mxu0 0
    %1113 = vmatprep.subr.bf16.mxu0 0
    %1114 = vmatpush2.bf16.msra.mxu0 0
    %1115 = vmatprep.subr.bf16.mxu0 0
    %1116 = vmatpush2.bf16.msra.mxu0 0
    %1117 = vmatprep.subr.bf16.mxu0 0
    %1118 = vmatpush2.bf16.msra.mxu0 0
    %1119 = vmatprep.subr.bf16.mxu0 0
    %1120 = vmatpush2.bf16.msra.mxu0 0
    %1121 = vmatprep.mubr.bf16.mxu0 0
    %1122 = vmatmul.mubr.bf16.gmra.mxu0 %v1088
    %v1123 = vpop.f32.mrf.mxu0
    %v1124 = vadd.f32 0.0, %v1123
    %v1125 = vpop.f32.mrf.mxu0
    %v1126 = vpop.f32.mrf.mxu0
    %v1127 = vpop.f32.mrf.mxu0
    %1128 = vdwg.mxu0
    %v1129 = vtanh.pop %v1124
    %v1130 = vpack.c.bf16 %v1129, %v1129
    %s1131 = scalar_lea.vmem [#allocation2], 92
    %v1132 = vld [vmem:[%s1131] sm:$0xf]
    %v1133 = vadd.bf16 %v1132, %v1130
    %1134 = vmatprep.subr.bf16.mxu0 0
    %1135 = vmatpush1.bf16.msra.mxu0 %v90
    %1136 = vmatprep.subr.bf16.mxu0 0
    %1137 = vmatpush1.bf16.msra.mxu0 %v89
    %1138 = vmatprep.subr.bf16.mxu0 0
    %1139 = vmatpush1.bf16.msra.mxu0 %v88
    %1140 = vmatprep.subr.bf16.mxu0 0
    %1141 = vmatpush1.bf16.msra.mxu0 %v87
    %1142 = vmatprep.subr.bf16.mxu0 0
    %1143 = vmatpush1.bf16.msra.mxu0 %v86
    %1144 = vmatprep.subr.bf16.mxu0 0
    %1145 = vmatpush1.bf16.msra.mxu0 %v85
    %1146 = vmatprep.subr.bf16.mxu0 0
    %1147 = vmatpush1.bf16.msra.mxu0 %v84
    %1148 = vmatprep.subr.bf16.mxu0 0
    %1149 = vmatpush1.bf16.msra.mxu0 %v83
    %1150 = vmatprep.subr.bf16.mxu0 0
    %1151 = vmatpush2.bf16.msra.mxu0 0
    %1152 = vmatprep.subr.bf16.mxu0 0
    %1153 = vmatpush2.bf16.msra.mxu0 0
    %1154 = vmatprep.subr.bf16.mxu0 0
    %1155 = vmatpush2.bf16.msra.mxu0 0
    %1156 = vmatprep.subr.bf16.mxu0 0
    %1157 = vmatpush2.bf16.msra.mxu0 0
    %1158 = vmatprep.subr.bf16.mxu0 0
    %1159 = vmatpush2.bf16.msra.mxu0 0
    %1160 = vmatprep.subr.bf16.mxu0 0
    %1161 = vmatpush2.bf16.msra.mxu0 0
    %1162 = vmatprep.subr.bf16.mxu0 0
    %1163 = vmatpush2.bf16.msra.mxu0 0
    %1164 = vmatprep.subr.bf16.mxu0 0
    %1165 = vmatpush2.bf16.msra.mxu0 0
    %1166 = vmatprep.mubr.bf16.mxu0 0
    %1167 = vmatmul.mubr.bf16.gmra.mxu0 %v1133
    %v1168 = vpop.f32.mrf.mxu0
    %v1169 = vadd.f32 0.0, %v1168
    %v1170 = vpop.f32.mrf.mxu0
    %v1171 = vpop.f32.mrf.mxu0
    %v1172 = vpop.f32.mrf.mxu0
    %1173 = vdwg.mxu0
    %v1174 = vtanh.pop %v1169
    %v1175 = vpack.c.bf16 %v1174, %v1174
    %s1176 = scalar_lea.vmem [#allocation2], 96
    %v1177 = vld [vmem:[%s1176] sm:$0xf]
    %v1178 = vadd.bf16 %v1177, %v1175
    %1179 = vmatprep.subr.bf16.mxu0 0
    %1180 = vmatpush1.bf16.msra.mxu0 %v90
    %1181 = vmatprep.subr.bf16.mxu0 0
    %1182 = vmatpush1.bf16.msra.mxu0 %v89
    %1183 = vmatprep.subr.bf16.mxu0 0
    %1184 = vmatpush1.bf16.msra.mxu0 %v88
    %1185 = vmatprep.subr.bf16.mxu0 0
    %1186 = vmatpush1.bf16.msra.mxu0 %v87
    %1187 = vmatprep.subr.bf16.mxu0 0
    %1188 = vmatpush1.bf16.msra.mxu0 %v86
    %1189 = vmatprep.subr.bf16.mxu0 0
    %1190 = vmatpush1.bf16.msra.mxu0 %v85
    %1191 = vmatprep.subr.bf16.mxu0 0
    %1192 = vmatpush1.bf16.msra.mxu0 %v84
    %1193 = vmatprep.subr.bf16.mxu0 0
    %1194 = vmatpush1.bf16.msra.mxu0 %v83
    %1195 = vmatprep.subr.bf16.mxu0 0
    %1196 = vmatpush2.bf16.msra.mxu0 0
    %1197 = vmatprep.subr.bf16.mxu0 0
    %1198 = vmatpush2.bf16.msra.mxu0 0
    %1199 = vmatprep.subr.bf16.mxu0 0
    %1200 = vmatpush2.bf16.msra.mxu0 0
    %1201 = vmatprep.subr.bf16.mxu0 0
    %1202 = vmatpush2.bf16.msra.mxu0 0
    %1203 = vmatprep.subr.bf16.mxu0 0
    %1204 = vmatpush2.bf16.msra.mxu0 0
    %1205 = vmatprep.subr.bf16.mxu0 0
    %1206 = vmatpush2.bf16.msra.mxu0 0
    %1207 = vmatprep.subr.bf16.mxu0 0
    %1208 = vmatpush2.bf16.msra.mxu0 0
    %1209 = vmatprep.subr.bf16.mxu0 0
    %1210 = vmatpush2.bf16.msra.mxu0 0
    %1211 = vmatprep.mubr.bf16.mxu0 0
    %1212 = vmatmul.mubr.bf16.gmra.mxu0 %v1178
    %v1213 = vpop.f32.mrf.mxu0
    %v1214 = vadd.f32 0.0, %v1213
    %v1215 = vpop.f32.mrf.mxu0
    %v1216 = vpop.f32.mrf.mxu0
    %v1217 = vpop.f32.mrf.mxu0
    %1218 = vdwg.mxu0
    %v1219 = vtanh.pop %v1214
    %v1220 = vpack.c.bf16 %v1219, %v1219
    %s1221 = scalar_lea.vmem [#allocation2], 100
    %v1222 = vld [vmem:[%s1221] sm:$0xf]
    %v1223 = vadd.bf16 %v1222, %v1220
    %1224 = vmatprep.subr.bf16.mxu0 0
    %1225 = vmatpush1.bf16.msra.mxu0 %v90
    %1226 = vmatprep.subr.bf16.mxu0 0
    %1227 = vmatpush1.bf16.msra.mxu0 %v89
    %1228 = vmatprep.subr.bf16.mxu0 0
    %1229 = vmatpush1.bf16.msra.mxu0 %v88
    %1230 = vmatprep.subr.bf16.mxu0 0
    %1231 = vmatpush1.bf16.msra.mxu0 %v87
    %1232 = vmatprep.subr.bf16.mxu0 0
    %1233 = vmatpush1.bf16.msra.mxu0 %v86
    %1234 = vmatprep.subr.bf16.mxu0 0
    %1235 = vmatpush1.bf16.msra.mxu0 %v85
    %1236 = vmatprep.subr.bf16.mxu0 0
    %1237 = vmatpush1.bf16.msra.mxu0 %v84
    %1238 = vmatprep.subr.bf16.mxu0 0
    %1239 = vmatpush1.bf16.msra.mxu0 %v83
    %1240 = vmatprep.subr.bf16.mxu0 0
    %1241 = vmatpush2.bf16.msra.mxu0 0
    %1242 = vmatprep.subr.bf16.mxu0 0
    %1243 = vmatpush2.bf16.msra.mxu0 0
    %1244 = vmatprep.subr.bf16.mxu0 0
    %1245 = vmatpush2.bf16.msra.mxu0 0
    %1246 = vmatprep.subr.bf16.mxu0 0
    %1247 = vmatpush2.bf16.msra.mxu0 0
    %1248 = vmatprep.subr.bf16.mxu0 0
    %1249 = vmatpush2.bf16.msra.mxu0 0
    %1250 = vmatprep.subr.bf16.mxu0 0
    %1251 = vmatpush2.bf16.msra.mxu0 0
    %1252 = vmatprep.subr.bf16.mxu0 0
    %1253 = vmatpush2.bf16.msra.mxu0 0
    %1254 = vmatprep.subr.bf16.mxu0 0
    %1255 = vmatpush2.bf16.msra.mxu0 0
    %1256 = vmatprep.mubr.bf16.mxu0 0
    %1257 = vmatmul.mubr.bf16.gmra.mxu0 %v1223
    %v1258 = vpop.f32.mrf.mxu0
    %v1259 = vadd.f32 0.0, %v1258
    %v1260 = vpop.f32.mrf.mxu0
    %v1261 = vpop.f32.mrf.mxu0
    %v1262 = vpop.f32.mrf.mxu0
    %1263 = vdwg.mxu0
    %v1264 = vtanh.pop %v1259
    %v1265 = vpack.c.bf16 %v1264, %v1264
    %s1266 = scalar_lea.vmem [#allocation2], 104
    %v1267 = vld [vmem:[%s1266] sm:$0xf]
    %v1268 = vadd.bf16 %v1267, %v1265
    %1269 = vmatprep.subr.bf16.mxu0 0
    %1270 = vmatpush1.bf16.msra.mxu0 %v90
    %1271 = vmatprep.subr.bf16.mxu0 0
    %1272 = vmatpush1.bf16.msra.mxu0 %v89
    %1273 = vmatprep.subr.bf16.mxu0 0
    %1274 = vmatpush1.bf16.msra.mxu0 %v88
    %1275 = vmatprep.subr.bf16.mxu0 0
    %1276 = vmatpush1.bf16.msra.mxu0 %v87
    %1277 = vmatprep.subr.bf16.mxu0 0
    %1278 = vmatpush1.bf16.msra.mxu0 %v86
    %1279 = vmatprep.subr.bf16.mxu0 0
    %1280 = vmatpush1.bf16.msra.mxu0 %v85
    %1281 = vmatprep.subr.bf16.mxu0 0
    %1282 = vmatpush1.bf16.msra.mxu0 %v84
    %1283 = vmatprep.subr.bf16.mxu0 0
    %1284 = vmatpush1.bf16.msra.mxu0 %v83
    %1285 = vmatprep.subr.bf16.mxu0 0
    %1286 = vmatpush2.bf16.msra.mxu0 0
    %1287 = vmatprep.subr.bf16.mxu0 0
    %1288 = vmatpush2.bf16.msra.mxu0 0
    %1289 = vmatprep.subr.bf16.mxu0 0
    %1290 = vmatpush2.bf16.msra.mxu0 0
    %1291 = vmatprep.subr.bf16.mxu0 0
    %1292 = vmatpush2.bf16.msra.mxu0 0
    %1293 = vmatprep.subr.bf16.mxu0 0
    %1294 = vmatpush2.bf16.msra.mxu0 0
    %1295 = vmatprep.subr.bf16.mxu0 0
    %1296 = vmatpush2.bf16.msra.mxu0 0
    %1297 = vmatprep.subr.bf16.mxu0 0
    %1298 = vmatpush2.bf16.msra.mxu0 0
    %1299 = vmatprep.subr.bf16.mxu0 0
    %1300 = vmatpush2.bf16.msra.mxu0 0
    %1301 = vmatprep.mubr.bf16.mxu0 0
    %1302 = vmatmul.mubr.bf16.gmra.mxu0 %v1268
    %v1303 = vpop.f32.mrf.mxu0
    %v1304 = vadd.f32 0.0, %v1303
    %v1305 = vpop.f32.mrf.mxu0
    %v1306 = vpop.f32.mrf.mxu0
    %v1307 = vpop.f32.mrf.mxu0
    %1308 = vdwg.mxu0
    %v1309 = vtanh.pop %v1304
    %v1310 = vpack.c.bf16 %v1309, %v1309
    %s1311 = scalar_lea.vmem [#allocation2], 108
    %v1312 = vld [vmem:[%s1311] sm:$0xf]
    %v1313 = vadd.bf16 %v1312, %v1310
    %1314 = vmatprep.subr.bf16.mxu0 0
    %1315 = vmatpush1.bf16.msra.mxu0 %v90
    %1316 = vmatprep.subr.bf16.mxu0 0
    %1317 = vmatpush1.bf16.msra.mxu0 %v89
    %1318 = vmatprep.subr.bf16.mxu0 0
    %1319 = vmatpush1.bf16.msra.mxu0 %v88
    %1320 = vmatprep.subr.bf16.mxu0 0
    %1321 = vmatpush1.bf16.msra.mxu0 %v87
    %1322 = vmatprep.subr.bf16.mxu0 0
    %1323 = vmatpush1.bf16.msra.mxu0 %v86
    %1324 = vmatprep.subr.bf16.mxu0 0
    %1325 = vmatpush1.bf16.msra.mxu0 %v85
    %1326 = vmatprep.subr.bf16.mxu0 0
    %1327 = vmatpush1.bf16.msra.mxu0 %v84
    %1328 = vmatprep.subr.bf16.mxu0 0
    %1329 = vmatpush1.bf16.msra.mxu0 %v83
    %1330 = vmatprep.subr.bf16.mxu0 0
    %1331 = vmatpush2.bf16.msra.mxu0 0
    %1332 = vmatprep.subr.bf16.mxu0 0
    %1333 = vmatpush2.bf16.msra.mxu0 0
    %1334 = vmatprep.subr.bf16.mxu0 0
    %1335 = vmatpush2.bf16.msra.mxu0 0
    %1336 = vmatprep.subr.bf16.mxu0 0
    %1337 = vmatpush2.bf16.msra.mxu0 0
    %1338 = vmatprep.subr.bf16.mxu0 0
    %1339 = vmatpush2.bf16.msra.mxu0 0
    %1340 = vmatprep.subr.bf16.mxu0 0
    %1341 = vmatpush2.bf16.msra.mxu0 0
    %1342 = vmatprep.subr.bf16.mxu0 0
    %1343 = vmatpush2.bf16.msra.mxu0 0
    %1344 = vmatprep.subr.bf16.mxu0 0
    %1345 = vmatpush2.bf16.msra.mxu0 0
    %1346 = vmatprep.mubr.bf16.mxu0 0
    %1347 = vmatmul.mubr.bf16.gmra.mxu0 %v1313
    %v1348 = vpop.f32.mrf.mxu0
    %v1349 = vadd.f32 0.0, %v1348
    %v1350 = vpop.f32.mrf.mxu0
    %v1351 = vpop.f32.mrf.mxu0
    %v1352 = vpop.f32.mrf.mxu0
    %1353 = vdwg.mxu0
    %v1354 = vtanh.pop %v1349
    %v1355 = vpack.c.bf16 %v1354, %v1354
    %v1356 = vld [vmem:[%s2] sm:$0xf]
    %v1357 = vld [vmem:[%s2 + $0x4] sm:$0xf]
    %v1358 = vld [vmem:[%s2 + $0x8] sm:$0xf]
    %v1359 = vld [vmem:[%s2 + $0xc] sm:$0xf]
    %v1360 = vld [vmem:[%s2 + $0x10] sm:$0xf]
    %v1361 = vld [vmem:[%s2 + $0x14] sm:$0xf]
    %v1362 = vld [vmem:[%s2 + $0x18] sm:$0xf]
    %v1363 = vld [vmem:[%s2 + $0x1c] sm:$0xf]
    %v1364 = vld [vmem:[%s2 + $0x20] sm:$0xf]
    %v1365 = vld [vmem:[%s2 + $0x24] sm:$0xf]
    %v1366 = vld [vmem:[%s2 + $0x28] sm:$0xf]
    %v1367 = vld [vmem:[%s2 + $0x2c] sm:$0xf]
    %v1368 = vld [vmem:[%s2 + $0x30] sm:$0xf]
    %v1369 = vld [vmem:[%s2 + $0x34] sm:$0xf]
    %v1370 = vld [vmem:[%s2 + $0x38] sm:$0xf]
    %v1371 = vld [vmem:[%s2 + $0x3c] sm:$0xf]
    %v1372 = vld [vmem:[%s3] sm:$0x1]
    %v1374 = vlaneseq
    %v1375 = vshrl.u32 %v1374, 7
    %v1376 = vsub.s32 0, %v1375
    %v1377 = vrot.slane %v1372, %v1376
    %v1395 = vunpack.c.l.b16 %v1356
    %v1396 = vunpack.c.l.b16 %v1357
    %v1397 = vunpack.c.l.b16 %v1358
    %v1398 = vunpack.c.l.b16 %v1359
    %v1399 = vunpack.c.l.b16 %v1360
    %v1400 = vunpack.c.l.b16 %v1361
    %v1401 = vunpack.c.l.b16 %v1362
    %v1402 = vunpack.c.l.b16 %v1363
    %v1403 = vunpack.c.l.b16 %v1364
    %v1404 = vunpack.c.l.b16 %v1365
    %v1405 = vunpack.c.l.b16 %v1366
    %v1406 = vunpack.c.l.b16 %v1367
    %v1407 = vunpack.c.l.b16 %v1368
    %v1408 = vunpack.c.l.b16 %v1369
    %v1409 = vunpack.c.l.b16 %v1370
    %v1410 = vunpack.c.l.b16 %v1371
    %v1411 = vpack.c.b16 %v1396, %v1395
    %v1412 = vpack.c.b16 %v1398, %v1397
    %v1413 = vpack.c.b16 %v1400, %v1399
    %v1414 = vpack.c.b16 %v1402, %v1401
    %v1415 = vpack.c.b16 %v1404, %v1403
    %v1416 = vpack.c.b16 %v1406, %v1405
    %v1417 = vpack.c.b16 %v1408, %v1407
    %v1418 = vpack.c.b16 %v1410, %v1409
    %1427 = vmatprep.subr.bf16.mxu0 0
    %1428 = vmatpush1.bf16.msra.mxu0 %v1418
    %1429 = vmatprep.subr.bf16.mxu0 0
    %1430 = vmatpush1.bf16.msra.mxu0 %v1417
    %1431 = vmatprep.subr.bf16.mxu0 0
    %1432 = vmatpush1.bf16.msra.mxu0 %v1416
    %1433 = vmatprep.subr.bf16.mxu0 0
    %1434 = vmatpush1.bf16.msra.mxu0 %v1415
    %1435 = vmatprep.subr.bf16.mxu0 0
    %1436 = vmatpush1.bf16.msra.mxu0 %v1414
    %1437 = vmatprep.subr.bf16.mxu0 0
    %1438 = vmatpush1.bf16.msra.mxu0 %v1413
    %1439 = vmatprep.subr.bf16.mxu0 0
    %1440 = vmatpush1.bf16.msra.mxu0 %v1412
    %1441 = vmatprep.subr.bf16.mxu0 0
    %1442 = vmatpush1.bf16.msra.mxu0 %v1411
    %1443 = vmatprep.subr.bf16.mxu0 0
    %1444 = vmatpush2.bf16.msra.mxu0 0
    %1445 = vmatprep.subr.bf16.mxu0 0
    %1446 = vmatpush2.bf16.msra.mxu0 0
    %1447 = vmatprep.subr.bf16.mxu0 0
    %1448 = vmatpush2.bf16.msra.mxu0 0
    %1449 = vmatprep.subr.bf16.mxu0 0
    %1450 = vmatpush2.bf16.msra.mxu0 0
    %1451 = vmatprep.subr.bf16.mxu0 0
    %1452 = vmatpush2.bf16.msra.mxu0 0
    %1453 = vmatprep.subr.bf16.mxu0 0
    %1454 = vmatpush2.bf16.msra.mxu0 0
    %1455 = vmatprep.subr.bf16.mxu0 0
    %1456 = vmatpush2.bf16.msra.mxu0 0
    %1457 = vmatprep.subr.bf16.mxu0 0
    %1458 = vmatpush2.bf16.msra.mxu0 0
    %1459 = vmatprep.mubr.bf16.mxu0 0
    %1460 = vmatmul.mubr.bf16.gmra.mxu0 %v1355
    %v1461 = vpop.f32.mrf.mxu0
    %v1462 = vadd.f32 %v1377, %v1461
    %v1463 = vpop.f32.mrf.mxu0
    %v1464 = vpop.f32.mrf.mxu0
    %v1465 = vpop.f32.mrf.mxu0
    %1466 = vdwg.mxu0
    %vm1467 = vcmask 80896
    %v1468 = vsel %vm1467, %v1462, -inf
    %1469 = vmax.xlane.f32.xlu0 %v1468
    %v1470 = vpop.xlane.xlu0 %1469
    %v1471 = vsub.f32 %v1462, %v1470
    %v1472 = vmul.f32 %v1471, 1.442695
    %v1473 = vpow.pop %v1472
    %v1474 = vsel %vm1467, %v1473, 0.0
    %1475 = vadd.xlane.f32.xlu0 %v1474
    %v1476 = vpop.xlane.xlu0 %1475
    %v1477 = vlog2.pop %v1476
    %v1478 = vmul.f32 %v1477, 0.6931472
    %v1479 = vsub.f32 %v1471, %v1478
    %1480 = vst.msk [vmem:[#allocation5] sm:$0xff] %vm1467, %v1479
    // Predicated region
    $region22: #{tpu_custom_call.1} parent=1 // pred_check
      _
    $region23: #{tpu_custom_call.1} parent=1 // pred_check_branch
      %1482 = sbr.rel (0) target = $region25
    $region24: #{tpu_custom_call.1} parent=1 // pred_region
      %s1484 = ssub.s32 128, 128
      %1485 = vsyncadd [#allocation4], %s1484
      %s1487 = sshll.u32 [#allocation5], 4
      %s1488 = int_to_ptr.vmem [resolvable:$true] %s1487
      %1490 = dma.vmem_to_hbm [thread:$0]  %s1488, 128, %s4, [#allocation4]
    $region25: #{tpu_custom_call.1} parent=1 // pred_fallthru
      _
    // Predicated region
    $region26: #{tpu_custom_call.1} parent=1 // pred_check
      _
    $region27: #{tpu_custom_call.1} parent=1 // pred_check_branch
      %1492 = sbr.rel (0) target = $region29
    $region28: #{tpu_custom_call.1} parent=1 // pred_region
      %1493 = dma.done [#allocation4], 128
    $region29: #{tpu_custom_call.1} parent=1 // pred_fallthru
      _
    %1494 = vsyncpa [#allocation3], 1
    %1495 = vsyncpa [#allocation4], 1

</llo_original>
